<compile_context>
chip_gen: v7x
topology: tpu7x:2x2x1
jax: 0.10.0
libtpu: 0.0.40
codegen_flags: <defaults>
</compile_context>

<pallas_src>
import math

import jax
import jax.numpy as jnp
from jax.experimental import pallas as pl
from jax.experimental.pallas import tpu as pltpu

LANE = 128


def _round_up(x, m):
    return ((x + m - 1) // m) * m


# ---------------------------------------------------------------------------
# Kernel
# ---------------------------------------------------------------------------
def _mut_drug_kernel(
    mut_ref, drug_ref,
    wm1, bm1, wd1, bd1,          # encoder layer 1 (per-stream, true-width K)
    we2, be2, we3, be3,          # encoder layers 2/3 (block-diagonal, 256-wide)
    wf1, bf1, wf2, bf2, wf3, bf3,  # final head (concat folded into wf1 rows)
    out_ref,
):
    # bf16 MXU matmul, f32 accumulate; bias add / ReLU in f32 (safe on v5e).
    def lin(x_bf16, w_ref, b_ref):
        return jnp.dot(x_bf16, w_ref[...],
                       preferred_element_type=jnp.float32) + b_ref[...]

    def relu_bf16(x_f32):
        return jnp.maximum(x_f32, 0.0).astype(jnp.bfloat16)

    mut = mut_ref[...].astype(jnp.bfloat16)      # in-kernel cast (VPU)
    drug = drug_ref[...].astype(jnp.bfloat16)

    # --- encoder layer 1: per-stream (true feature width), then lane-concat
    #     into one 256-wide fused activation (halves are 128-lane aligned) ---
    m1 = relu_bf16(lin(mut, wm1, bm1))
    d1 = relu_bf16(lin(drug, wd1, bd1))
    h = jnp.concatenate([m1, d1], axis=-1)

    # --- encoder layers 2/3: fused block-diagonal 256-wide MXU matmuls ------
    h = relu_bf16(lin(h, we2, be2))
    h = relu_bf16(lin(h, we3, be3))

    # --- final head: concat([m, d]) @ Wf1 folded into Wf1's row placement ---
    f = relu_bf16(lin(h, wf1, bf1))
    f = relu_bf16(lin(f, wf2, bf2))
    # Store pre-activation; sigmoid is applied in the wrapper on the single
    # meaningful lane (avoids 128x redundant EUP work on dead lanes).
    out_ref[...] = lin(f, wf3, bf3)


# ---------------------------------------------------------------------------
# Wrapper: batch-gridded, pipelined pallas_call
# ---------------------------------------------------------------------------
def mut_drug_forward(mut, drug, kernel_params, *, max_batch_tile=2048):
    (wm1, bm1, wd1, bd1, we2, be2, we3, be3,
     wf1, bf1, wf2, bf2, wf3, bf3) = kernel_params

    batch = mut.shape[0]
    num_mut = mut.shape[1]
    num_drug = drug.shape[1]
    out_p = wf3.shape[1]            # 128-lane padded output width
    fused_w = we2.shape[0]          # fused encoder activation width (e.g. 256)

    weight_bytes = sum(int(p.size) * p.dtype.itemsize for p in kernel_params)

    # VMEM-aware batch-tile choice.  Constant-index param blocks are still
    # double-buffered by the default pipeline, so count them twice.
    def step_bytes(t):
        io = 2 * t * (num_mut + num_drug) * 4   # f32 inputs, double-buffered
        io += 2 * t * out_p * 4                 # f32 output, double-buffered
        act = 6 * t * fused_w * 4               # f32 activation working set
        return 2 * weight_bytes + io + act

    kind = ""
    try:
        kind = jax.devices()[0].device_kind.lower()
    except Exception:
        pass
    if "v7" in kind:
        budget = 36 * 1024 * 1024       # v7x: 64 MiB physical VMEM per TC
    elif kind:
        budget = 80 * 1024 * 1024       # v5e/v6e: 128 MiB physical VMEM
    else:
        budget = 32 * 1024 * 1024       # unknown: stay conservative

    # Largest batch tile that fits the budget, multiple of 16 (bf16 sublanes).
    tb = min(max_batch_tile, _round_up(batch, 16))
    while tb > 16 and step_bytes(tb) > budget:
        tb //= 2
    tb = max(16, (tb // 16) * 16)

    # Guarantee >= 2 grid steps when the batch allows, so the "parallel" batch
    # axis can shard across v7x's two TensorCores (and megacore on v5e/v6e).
    batch16 = _round_up(batch, 16)
    if tb >= batch16 and batch16 >= 32:
        tb = _round_up(batch16 // 2, 16)

    batch_p = _round_up(batch, tb)
    grid = (batch_p // tb,)

    if batch_p != batch:
        mut = jnp.pad(mut, ((0, batch_p - batch), (0, 0)))
        drug = jnp.pad(drug, ((0, batch_p - batch), (0, 0)))

    data_specs = [
        pl.BlockSpec((tb, num_mut), lambda i: (i, 0)),
        pl.BlockSpec((tb, num_drug), lambda i: (i, 0)),
    ]
    # Constant index_map => weights/biases stay VMEM-resident across tiles.
    param_specs = [pl.BlockSpec(p.shape, lambda i: (0, 0)) for p in kernel_params]

    weight_shapes = [wm1.shape, wd1.shape, we2.shape, we3.shape,
                     wf1.shape, wf2.shape, wf3.shape]
    flops = 2 * batch_p * sum(int(k) * int(n) for k, n in weight_shapes)
    bytes_accessed = (mut.size * 4 + drug.size * 4
                      + weight_bytes + batch_p * out_p * 4)
    cost = pl.CostEstimate(flops=int(flops), transcendentals=0,
                           bytes_accessed=int(bytes_accessed))

    vmem_limit = int(max(budget, step_bytes(tb)) + 8 * 1024 * 1024)

    out_padded = pl.pallas_call(
        _mut_drug_kernel,
        out_shape=jax.ShapeDtypeStruct((batch_p, out_p), jnp.float32),
        grid=grid,
        in_specs=data_specs + param_specs,
        out_specs=pl.BlockSpec((tb, out_p), lambda i: (i, 0)),
        compiler_params=pltpu.CompilerParams(
            dimension_semantics=("parallel",),
            vmem_limit_bytes=vmem_limit,
        ),
        cost_estimate=cost,
    )(mut, drug, *kernel_params)

    # activation_func_final (sigmoid), applied only to the meaningful lane.
    return jax.nn.sigmoid(out_padded[:batch, :1])


# ---------------------------------------------------------------------------
# Parameter init (kaiming_uniform a=0 / zero bias, as the module's explicit
# init), stored as [in, out] so layers compute x @ W.
# ---------------------------------------------------------------------------
def _kaiming_uniform(key, fan_in, fan_out):
    # kaiming_uniform_(a=0, mode='fan_in', nonlinearity='leaky_relu'):
    # gain = sqrt(2), bound = gain * sqrt(3 / fan_in).
    bound = math.sqrt(2.0) * math.sqrt(3.0 / fan_in)
    return jax.random.uniform(key, (fan_in, fan_out), jnp.float32, -bound, bound)


def init_params(key, num_mut, num_drug, mut_dims, drug_dims, dense_dim):
    # TODO(synk): the mut encoder's PyTorch *default* Linear init (a=sqrt(5),
    # uniform bias) / TCGA pretrained-weight loading differ; forward-pass
    # semantics are unaffected.
    keys = iter(jax.random.split(key, 9))

    def layer(fin, fout):
        return _kaiming_uniform(next(keys), fin, fout), jnp.zeros((1, fout), jnp.float32)

    wm1, bm1 = layer(num_mut, mut_dims[0])
    wm2, bm2 = layer(mut_dims[0], mut_dims[1])
    wm3, bm3 = layer(mut_dims[1], mut_dims[2])
    wd1, bd1 = layer(num_drug, drug_dims[0])
    wd2, bd2 = layer(drug_dims[0], drug_dims[1])
    wd3, bd3 = layer(drug_dims[1], drug_dims[2])
    final_in = mut_dims[2] + drug_dims[2]
    wf1, bf1 = layer(final_in, dense_dim)
    wf2, bf2 = layer(dense_dim, dense_dim)
    wf3, bf3 = layer(dense_dim, 1)
    return (wm1, bm1, wm2, bm2, wm3, bm3,
            wd1, bd1, wd2, bd2, wd3, bd3,
            wf1, bf1, wf2, bf2, wf3, bf3)


# ---------------------------------------------------------------------------
# Build fused, lane-padded kernel parameters.
#   - Encoder layer 1 stays per-stream (true-width contraction dims).
#   - Encoder layers 2/3 become 256-wide block-diagonal weights.
#   - Head layer 1 folds concat([mut_embed, drug_embed]) into its row layout.
# Padding is math-inert: padded weight rows/cols and bias lanes are zero and
# ReLU(0) = 0, so padded activation lanes stay exactly zero.
# Weights -> bf16 (MXU), biases -> f32.
# ---------------------------------------------------------------------------
def fuse_and_pad_params(params):
    (wm1, bm1, wm2, bm2, wm3, bm3,
     wd1, bd1, wd2, bd2, wd3, bd3,
     wf1, bf1, wf2, bf2, wf3, bf3) = params

    def pad_w(w, rows, cols):
        buf = jnp.zeros((rows, cols), jnp.bfloat16)
        return buf.at[:w.shape[0], :w.shape[1]].set(w.astype(jnp.bfloat16))

    def pad_b(b, cols):
        buf = jnp.zeros((1, cols), jnp.float32)
        return buf.at[:, :b.shape[1]].set(b.astype(jnp.float32))

    mut_dims = (wm1.shape[1], wm2.shape[1], wm3.shape[1])
    drug_dims = (wd1.shape[1], wd2.shape[1], wd3.shape[1])
    Hm = [_round_up(d, LANE) for d in mut_dims]
    Hd = [_round_up(d, LANE) for d in drug_dims]
    Dd = _round_up(wf2.shape[0], LANE)     # dense_layer_dim padded
    Do = _round_up(wf3.shape[1], LANE)     # output width (1) padded to 128

    # Encoder layer 1: true-width input rows, lane-padded output columns.
    Wm1 = pad_w(wm1, wm1.shape[0], Hm[0]); Bm1 = pad_b(bm1, Hm[0])
    Wd1 = pad_w(wd1, wd1.shape[0], Hd[0]); Bd1 = pad_b(bd1, Hd[0])

    def blockdiag(wa, wb, rows_a, rows_b, cols_a, cols_b):
        buf = jnp.zeros((rows_a + rows_b, cols_a + cols_b), jnp.bfloat16)
        buf = buf.at[:wa.shape[0], :wa.shape[1]].set(wa.astype(jnp.bfloat16))
        buf = buf.at[rows_a:rows_a + wb.shape[0],
                     cols_a:cols_a + wb.shape[1]].set(wb.astype(jnp.bfloat16))
        return buf

    def cat_bias(ba, bb, cols_a, cols_b):
        buf = jnp.zeros((1, cols_a + cols_b), jnp.float32)
        buf = buf.at[:, :ba.shape[1]].set(ba.astype(jnp.float32))
        buf = buf.at[:, cols_a:cols_a + bb.shape[1]].set(bb.astype(jnp.float32))
        return buf

    We2 = blockdiag(wm2, wd2, Hm[0], Hd[0], Hm[1], Hd[1])
    Be2 = cat_bias(bm2, bd2, Hm[1], Hd[1])
    We3 = blockdiag(wm3, wd3, Hm[1], Hd[1], Hm[2], Hd[2])
    Be3 = cat_bias(bm3, bd3, Hm[2], Hd[2])

    # Head layer 1: fold the concat into the weight's row placement.
    m3 = mut_dims[2]
    Wf1 = jnp.zeros((Hm[2] + Hd[2], Dd), jnp.bfloat16)
    Wf1 = Wf1.at[:m3, :wf1.shape[1]].set(wf1[:m3].astype(jnp.bfloat16))
    Wf1 = Wf1.at[Hm[2]:Hm[2] + (wf1.shape[0] - m3),
                 :wf1.shape[1]].set(wf1[m3:].astype(jnp.bfloat16))
    Bf1 = pad_b(bf1, Dd)

    Wf2 = pad_w(wf2, Dd, Dd); Bf2 = pad_b(bf2, Dd)
    Wf3 = pad_w(wf3, Dd, Do); Bf3 = pad_b(bf3, Do)

    return (Wm1, Bm1, Wd1, Bd1, We2, Be2, We3, Be3,
            Wf1, Bf1, Wf2, Bf2, Wf3, Bf3)


# ---------------------------------------------------------------------------
# Pure-JAX reference with the same bf16-matmul / f32-accumulate arithmetic
# on the ORIGINAL (unfused) parameters.
# ---------------------------------------------------------------------------
def _reference_forward(mut, drug, params):
    (wm1, bm1, wm2, bm2, wm3, bm3,
     wd1, bd1, wd2, bd2, wd3, bd3,
     wf1, bf1, wf2, bf2, wf3, bf3) = params

    def lin(x, w, b):
        return jnp.dot(x.astype(jnp.bfloat16), w.astype(jnp.bfloat16),
                       preferred_element_type=jnp.float32) + b

    relu = lambda x: jnp.maximum(x, 0.0).astype(jnp.bfloat16)
    m = relu(lin(mut, wm1, bm1))
    m = relu(lin(m, wm2, bm2))
    m = relu(lin(m, wm3, bm3))
    d = relu(lin(drug, wd1, bd1))
    d = relu(lin(d, wd2, bd2))
    d = relu(lin(d, wd3, bd3))
    c = jnp.concatenate([m, d], axis=1)
    f = relu(lin(c, wf1, bf1))
    f = relu(lin(f, wf2, bf2))
    return jax.nn.sigmoid(lin(f, wf3, bf3))


if __name__ == "__main__":
    # Small, forward-consistent shapes.
    batch = 8
    num_mut_features = 64
    num_drug_features = 32
    mut_encode_dim = (64, 32, 16)
    drug_encode_dim = (32, 32, 16)
    dense_layer_dim = 32

    root = jax.random.PRNGKey(0)
    k_mut, k_drug, k_params = jax.random.split(root, 3)

    mut = jax.random.normal(k_mut, (batch, num_mut_features), jnp.float32)
    drug = jax.random.normal(k_drug, (batch, num_drug_features), jnp.float32)

    params = init_params(
        k_params, num_mut_features, num_drug_features,
        mut_encode_dim, drug_encode_dim, dense_layer_dim,
    )
    kernel_params = fuse_and_pad_params(params)

    out = mut_drug_forward(mut, drug, kernel_params)
    out = jax.block_until_ready(out)

    ref = _reference_forward(mut, drug, params)
    assert out.shape == (batch, 1)
    max_err = float(jnp.max(jnp.abs(out - ref)))
    assert jnp.allclose(out, ref, atol=1e-3, rtol=1e-3), (
        "max abs err = %g" % max_err)

    print("KERNEL_OK")
</pallas_src>

<mosaic_0001>
module attributes {stable_mosaic.version = 11 : i64} {
  func.func @_mut_drug_kernel(%arg0: i32, %arg1: memref<16x64xf32, #tpu.memory_space<vmem>>, %arg2: memref<16x32xf32, #tpu.memory_space<vmem>>, %arg3: memref<64x128xbf16, #tpu.memory_space<vmem>>, %arg4: memref<1x128xf32, #tpu.memory_space<vmem>>, %arg5: memref<32x128xbf16, #tpu.memory_space<vmem>>, %arg6: memref<1x128xf32, #tpu.memory_space<vmem>>, %arg7: memref<256x256xbf16, #tpu.memory_space<vmem>>, %arg8: memref<1x256xf32, #tpu.memory_space<vmem>>, %arg9: memref<256x256xbf16, #tpu.memory_space<vmem>>, %arg10: memref<1x256xf32, #tpu.memory_space<vmem>>, %arg11: memref<256x128xbf16, #tpu.memory_space<vmem>>, %arg12: memref<1x128xf32, #tpu.memory_space<vmem>>, %arg13: memref<128x128xbf16, #tpu.memory_space<vmem>>, %arg14: memref<1x128xf32, #tpu.memory_space<vmem>>, %arg15: memref<128x128xbf16, #tpu.memory_space<vmem>>, %arg16: memref<1x128xf32, #tpu.memory_space<vmem>>, %arg17: memref<16x128xf32, #tpu.memory_space<vmem>>) attributes {dimension_semantics = [#tpu.dimension_semantics<parallel>], iteration_bounds = array<i64: 1>, scalar_prefetch = 0 : i64, scratch_operands = 0 : i64, tpu.core_type = #tpu.core_type<tc>, window_params = [{transform_indices = @transform_0, window_bounds = array<i64: 16, 64>}, {transform_indices = @transform_1, window_bounds = array<i64: 16, 32>}, {pipeline_mode = #tpu.pipeline_mode<synchronous>, transform_indices = @transform_2, window_bounds = array<i64: 64, 128>}, {pipeline_mode = #tpu.pipeline_mode<synchronous>, transform_indices = @transform_3, window_bounds = array<i64: 1, 128>}, {pipeline_mode = #tpu.pipeline_mode<synchronous>, transform_indices = @transform_4, window_bounds = array<i64: 32, 128>}, {pipeline_mode = #tpu.pipeline_mode<synchronous>, transform_indices = @transform_5, window_bounds = array<i64: 1, 128>}, {pipeline_mode = #tpu.pipeline_mode<synchronous>, transform_indices = @transform_6, window_bounds = array<i64: 256, 256>}, {pipeline_mode = #tpu.pipeline_mode<synchronous>, transform_indices = @transform_7, window_bounds = array<i64: 1, 256>}, {pipeline_mode = #tpu.pipeline_mode<synchronous>, transform_indices = @transform_8, window_bounds = array<i64: 256, 256>}, {pipeline_mode = #tpu.pipeline_mode<synchronous>, transform_indices = @transform_9, window_bounds = array<i64: 1, 256>}, {pipeline_mode = #tpu.pipeline_mode<synchronous>, transform_indices = @transform_10, window_bounds = array<i64: 256, 128>}, {pipeline_mode = #tpu.pipeline_mode<synchronous>, transform_indices = @transform_11, window_bounds = array<i64: 1, 128>}, {pipeline_mode = #tpu.pipeline_mode<synchronous>, transform_indices = @transform_12, window_bounds = array<i64: 128, 128>}, {pipeline_mode = #tpu.pipeline_mode<synchronous>, transform_indices = @transform_13, window_bounds = array<i64: 1, 128>}, {pipeline_mode = #tpu.pipeline_mode<synchronous>, transform_indices = @transform_14, window_bounds = array<i64: 128, 128>}, {pipeline_mode = #tpu.pipeline_mode<synchronous>, transform_indices = @transform_15, window_bounds = array<i64: 1, 128>}, {transform_indices = @transform_16, window_bounds = array<i64: 16, 128>}]} {
    %c0 = arith.constant 0 : index
    %c0_0 = arith.constant 0 : index
    %0 = vector.load %arg1[%c0, %c0_0] : memref<16x64xf32, #tpu.memory_space<vmem>>, vector<16x64xf32>
    %1 = arith.truncf %0 : vector<16x64xf32> to vector<16x64xbf16>
    %c0_1 = arith.constant 0 : index
    %c0_2 = arith.constant 0 : index
    %2 = vector.load %arg2[%c0_1, %c0_2] : memref<16x32xf32, #tpu.memory_space<vmem>>, vector<16x32xf32>
    %3 = arith.truncf %2 : vector<16x32xf32> to vector<16x32xbf16>
    %c0_3 = arith.constant 0 : index
    %c0_4 = arith.constant 0 : index
    %4 = vector.load %arg3[%c0_3, %c0_4] : memref<64x128xbf16, #tpu.memory_space<vmem>>, vector<64x128xbf16>
    %cst = arith.constant dense<0.000000e+00> : vector<16x128xf32>
    %5 = tpu.matmul %1, %4, %cst {dimension_numbers = #tpu.dot_dimension_numbers<[1], [0], [0], [1], [0, 0, 1, 1], [], []>} : vector<16x64xbf16>, vector<64x128xbf16>, vector<16x128xf32> -> vector<16x128xf32>
    %c0_5 = arith.constant 0 : index
    %c0_6 = arith.constant 0 : index
    %6 = vector.load %arg4[%c0_5, %c0_6] : memref<1x128xf32, #tpu.memory_space<vmem>>, vector<1x128xf32>
    %7 = vector.broadcast %6 : vector<1x128xf32> to vector<16x128xf32>
    %8 = arith.addf %5, %7 : vector<16x128xf32>
    %cst_7 = arith.constant 0.000000e+00 : f32
    %9 = vector.broadcast %cst_7 : f32 to vector<16x128xf32>
    %10 = arith.maximumf %8, %9 : vector<16x128xf32>
    %11 = arith.truncf %10 : vector<16x128xf32> to vector<16x128xbf16>
    %c0_8 = arith.constant 0 : index
    %c0_9 = arith.constant 0 : index
    %12 = vector.load %arg5[%c0_8, %c0_9] : memref<32x128xbf16, #tpu.memory_space<vmem>>, vector<32x128xbf16>
    %cst_10 = arith.constant dense<0.000000e+00> : vector<16x128xf32>
    %13 = tpu.matmul %3, %12, %cst_10 {dimension_numbers = #tpu.dot_dimension_numbers<[1], [0], [0], [1], [0, 0, 1, 1], [], []>} : vector<16x32xbf16>, vector<32x128xbf16>, vector<16x128xf32> -> vector<16x128xf32>
    %c0_11 = arith.constant 0 : index
    %c0_12 = arith.constant 0 : index
    %14 = vector.load %arg6[%c0_11, %c0_12] : memref<1x128xf32, #tpu.memory_space<vmem>>, vector<1x128xf32>
    %15 = vector.broadcast %14 : vector<1x128xf32> to vector<16x128xf32>
    %16 = arith.addf %13, %15 : vector<16x128xf32>
    %cst_13 = arith.constant 0.000000e+00 : f32
    %17 = vector.broadcast %cst_13 : f32 to vector<16x128xf32>
    %18 = arith.maximumf %16, %17 : vector<16x128xf32>
    %19 = arith.truncf %18 : vector<16x128xf32> to vector<16x128xbf16>
    %20 = tpu.concatenate %11, %19 in 1 : vector<16x128xbf16>, vector<16x128xbf16> -> vector<16x256xbf16>
    %c0_14 = arith.constant 0 : index
    %c0_15 = arith.constant 0 : index
    %21 = vector.load %arg7[%c0_14, %c0_15] : memref<256x256xbf16, #tpu.memory_space<vmem>>, vector<256x256xbf16>
    %cst_16 = arith.constant dense<0.000000e+00> : vector<16x256xf32>
    %22 = tpu.matmul %20, %21, %cst_16 {dimension_numbers = #tpu.dot_dimension_numbers<[1], [0], [0], [1], [0, 0, 1, 1], [], []>} : vector<16x256xbf16>, vector<256x256xbf16>, vector<16x256xf32> -> vector<16x256xf32>
    %c0_17 = arith.constant 0 : index
    %c0_18 = arith.constant 0 : index
    %23 = vector.load %arg8[%c0_17, %c0_18] : memref<1x256xf32, #tpu.memory_space<vmem>>, vector<1x256xf32>
    %24 = vector.broadcast %23 : vector<1x256xf32> to vector<16x256xf32>
    %25 = arith.addf %22, %24 : vector<16x256xf32>
    %cst_19 = arith.constant 0.000000e+00 : f32
    %26 = vector.broadcast %cst_19 : f32 to vector<16x256xf32>
    %27 = arith.maximumf %25, %26 : vector<16x256xf32>
    %28 = arith.truncf %27 : vector<16x256xf32> to vector<16x256xbf16>
    %c0_20 = arith.constant 0 : index
    %c0_21 = arith.constant 0 : index
    %29 = vector.load %arg9[%c0_20, %c0_21] : memref<256x256xbf16, #tpu.memory_space<vmem>>, vector<256x256xbf16>
    %cst_22 = arith.constant dense<0.000000e+00> : vector<16x256xf32>
    %30 = tpu.matmul %28, %29, %cst_22 {dimension_numbers = #tpu.dot_dimension_numbers<[1], [0], [0], [1], [0, 0, 1, 1], [], []>} : vector<16x256xbf16>, vector<256x256xbf16>, vector<16x256xf32> -> vector<16x256xf32>
    %c0_23 = arith.constant 0 : index
    %c0_24 = arith.constant 0 : index
    %31 = vector.load %arg10[%c0_23, %c0_24] : memref<1x256xf32, #tpu.memory_space<vmem>>, vector<1x256xf32>
    %32 = vector.broadcast %31 : vector<1x256xf32> to vector<16x256xf32>
    %33 = arith.addf %30, %32 : vector<16x256xf32>
    %cst_25 = arith.constant 0.000000e+00 : f32
    %34 = vector.broadcast %cst_25 : f32 to vector<16x256xf32>
    %35 = arith.maximumf %33, %34 : vector<16x256xf32>
    %36 = arith.truncf %35 : vector<16x256xf32> to vector<16x256xbf16>
    %c0_26 = arith.constant 0 : index
    %c0_27 = arith.constant 0 : index
    %37 = vector.load %arg11[%c0_26, %c0_27] : memref<256x128xbf16, #tpu.memory_space<vmem>>, vector<256x128xbf16>
    %cst_28 = arith.constant dense<0.000000e+00> : vector<16x128xf32>
    %38 = tpu.matmul %36, %37, %cst_28 {dimension_numbers = #tpu.dot_dimension_numbers<[1], [0], [0], [1], [0, 0, 1, 1], [], []>} : vector<16x256xbf16>, vector<256x128xbf16>, vector<16x128xf32> -> vector<16x128xf32>
    %c0_29 = arith.constant 0 : index
    %c0_30 = arith.constant 0 : index
    %39 = vector.load %arg12[%c0_29, %c0_30] : memref<1x128xf32, #tpu.memory_space<vmem>>, vector<1x128xf32>
    %40 = vector.broadcast %39 : vector<1x128xf32> to vector<16x128xf32>
    %41 = arith.addf %38, %40 : vector<16x128xf32>
    %cst_31 = arith.constant 0.000000e+00 : f32
    %42 = vector.broadcast %cst_31 : f32 to vector<16x128xf32>
    %43 = arith.maximumf %41, %42 : vector<16x128xf32>
    %44 = arith.truncf %43 : vector<16x128xf32> to vector<16x128xbf16>
    %c0_32 = arith.constant 0 : index
    %c0_33 = arith.constant 0 : index
    %45 = vector.load %arg13[%c0_32, %c0_33] : memref<128x128xbf16, #tpu.memory_space<vmem>>, vector<128x128xbf16>
    %cst_34 = arith.constant dense<0.000000e+00> : vector<16x128xf32>
    %46 = tpu.matmul %44, %45, %cst_34 {dimension_numbers = #tpu.dot_dimension_numbers<[1], [0], [0], [1], [0, 0, 1, 1], [], []>} : vector<16x128xbf16>, vector<128x128xbf16>, vector<16x128xf32> -> vector<16x128xf32>
    %c0_35 = arith.constant 0 : index
    %c0_36 = arith.constant 0 : index
    %47 = vector.load %arg14[%c0_35, %c0_36] : memref<1x128xf32, #tpu.memory_space<vmem>>, vector<1x128xf32>
    %48 = vector.broadcast %47 : vector<1x128xf32> to vector<16x128xf32>
    %49 = arith.addf %46, %48 : vector<16x128xf32>
    %cst_37 = arith.constant 0.000000e+00 : f32
    %50 = vector.broadcast %cst_37 : f32 to vector<16x128xf32>
    %51 = arith.maximumf %49, %50 : vector<16x128xf32>
    %52 = arith.truncf %51 : vector<16x128xf32> to vector<16x128xbf16>
    %c0_38 = arith.constant 0 : index
    %c0_39 = arith.constant 0 : index
    %53 = vector.load %arg15[%c0_38, %c0_39] : memref<128x128xbf16, #tpu.memory_space<vmem>>, vector<128x128xbf16>
    %cst_40 = arith.constant dense<0.000000e+00> : vector<16x128xf32>
    %54 = tpu.matmul %52, %53, %cst_40 {dimension_numbers = #tpu.dot_dimension_numbers<[1], [0], [0], [1], [0, 0, 1, 1], [], []>} : vector<16x128xbf16>, vector<128x128xbf16>, vector<16x128xf32> -> vector<16x128xf32>
    %c0_41 = arith.constant 0 : index
    %c0_42 = arith.constant 0 : index
    %55 = vector.load %arg16[%c0_41, %c0_42] : memref<1x128xf32, #tpu.memory_space<vmem>>, vector<1x128xf32>
    %56 = vector.broadcast %55 : vector<1x128xf32> to vector<16x128xf32>
    %57 = arith.addf %54, %56 : vector<16x128xf32>
    %c0_43 = arith.constant 0 : index
    %c0_44 = arith.constant 0 : index
    %58 = vector.load %arg17[%c0_43, %c0_44] : memref<16x128xf32, #tpu.memory_space<vmem>>, vector<16x128xf32>
    tpu.vector_store %arg17[%c0_43, %c0_44], %57 {strides = array<i32>} : memref<16x128xf32, #tpu.memory_space<vmem>>, vector<16x128xf32>,
    return
  }
  func.func @transform_0(%arg0: i32) -> (i32, i32) {
    %c0_i32 = arith.constant 0 : i32
    %c0_i32_0 = arith.constant 0 : i32
    return %arg0, %c0_i32 : i32, i32
  }
  func.func @transform_1(%arg0: i32) -> (i32, i32) {
    %c0_i32 = arith.constant 0 : i32
    %c0_i32_0 = arith.constant 0 : i32
    return %arg0, %c0_i32 : i32, i32
  }
  func.func @transform_2(%arg0: i32) -> (i32, i32) {
    %c0_i32 = arith.constant 0 : i32
    %c0_i32_0 = arith.constant 0 : i32
    %c0_i32_1 = arith.constant 0 : i32
    return %c0_i32, %c0_i32_0 : i32, i32
  }
  func.func @transform_3(%arg0: i32) -> (i32, i32) {
    %c0_i32 = arith.constant 0 : i32
    %c0_i32_0 = arith.constant 0 : i32
    %c0_i32_1 = arith.constant 0 : i32
    return %c0_i32, %c0_i32_0 : i32, i32
  }
  func.func @transform_4(%arg0: i32) -> (i32, i32) {
    %c0_i32 = arith.constant 0 : i32
    %c0_i32_0 = arith.constant 0 : i32
    %c0_i32_1 = arith.constant 0 : i32
    return %c0_i32, %c0_i32_0 : i32, i32
  }
  func.func @transform_5(%arg0: i32) -> (i32, i32) {
    %c0_i32 = arith.constant 0 : i32
    %c0_i32_0 = arith.constant 0 : i32
    %c0_i32_1 = arith.constant 0 : i32
    return %c0_i32, %c0_i32_0 : i32, i32
  }
  func.func @transform_6(%arg0: i32) -> (i32, i32) {
    %c0_i32 = arith.constant 0 : i32
    %c0_i32_0 = arith.constant 0 : i32
    %c0_i32_1 = arith.constant 0 : i32
    return %c0_i32, %c0_i32_0 : i32, i32
  }
  func.func @transform_7(%arg0: i32) -> (i32, i32) {
    %c0_i32 = arith.constant 0 : i32
    %c0_i32_0 = arith.constant 0 : i32
    %c0_i32_1 = arith.constant 0 : i32
    return %c0_i32, %c0_i32_0 : i32, i32
  }
  func.func @transform_8(%arg0: i32) -> (i32, i32) {
    %c0_i32 = arith.constant 0 : i32
    %c0_i32_0 = arith.constant 0 : i32
    %c0_i32_1 = arith.constant 0 : i32
    return %c0_i32, %c0_i32_0 : i32, i32
  }
  func.func @transform_9(%arg0: i32) -> (i32, i32) {
    %c0_i32 = arith.constant 0 : i32
    %c0_i32_0 = arith.constant 0 : i32
    %c0_i32_1 = arith.constant 0 : i32
    return %c0_i32, %c0_i32_0 : i32, i32
  }
  func.func @transform_10(%arg0: i32) -> (i32, i32) {
    %c0_i32 = arith.constant 0 : i32
    %c0_i32_0 = arith.constant 0 : i32
    %c0_i32_1 = arith.constant 0 : i32
    return %c0_i32, %c0_i32_0 : i32, i32
  }
  func.func @transform_11(%arg0: i32) -> (i32, i32) {
    %c0_i32 = arith.constant 0 : i32
    %c0_i32_0 = arith.constant 0 : i32
    %c0_i32_1 = arith.constant 0 : i32
    return %c0_i32, %c0_i32_0 : i32, i32
  }
  func.func @transform_12(%arg0: i32) -> (i32, i32) {
    %c0_i32 = arith.constant 0 : i32
    %c0_i32_0 = arith.constant 0 : i32
    %c0_i32_1 = arith.constant 0 : i32
    return %c0_i32, %c0_i32_0 : i32, i32
  }
  func.func @transform_13(%arg0: i32) -> (i32, i32) {
    %c0_i32 = arith.constant 0 : i32
    %c0_i32_0 = arith.constant 0 : i32
    %c0_i32_1 = arith.constant 0 : i32
    return %c0_i32, %c0_i32_0 : i32, i32
  }
  func.func @transform_14(%arg0: i32) -> (i32, i32) {
    %c0_i32 = arith.constant 0 : i32
    %c0_i32_0 = arith.constant 0 : i32
    %c0_i32_1 = arith.constant 0 : i32
    return %c0_i32, %c0_i32_0 : i32, i32
  }
  func.func @transform_15(%arg0: i32) -> (i32, i32) {
    %c0_i32 = arith.constant 0 : i32
    %c0_i32_0 = arith.constant 0 : i32
    %c0_i32_1 = arith.constant 0 : i32
    return %c0_i32, %c0_i32_0 : i32, i32
  }
  func.func @transform_16(%arg0: i32) -> (i32, i32) {
    %c0_i32 = arith.constant 0 : i32
    %c0_i32_0 = arith.constant 0 : i32
    return %arg0, %c0_i32 : i32, i32
  }
}

</mosaic_0001>

<llo_original>
// kernel: tpu_custom_call.1
$region0: #{tpu_custom_call.1}
  #allocation0 [shape = 'u32[]', space=smem, size = 0x4, offset = 0x4, fixed_abs, tag = 'smem constant byte address 0x4 - core index']
  #allocation1 [shape = 'u32[144,128]{1,0:T(1,128)}', space=vmem, size = 0x12000, scoped, tag = 'internal scratch']
  %s0 = inlined_call_operand.hbm [shape: f32[16,64], index: 0, kind: input, shape index: {}]
  %s1 = inlined_call_operand.hbm [shape: f32[16,32], index: 1, kind: input, shape index: {}]
  %s2 = inlined_call_operand.hbm [shape: bf16[64,128], index: 2, kind: input, shape index: {}]
  %s3 = inlined_call_operand.hbm [shape: f32[1,128], index: 3, kind: input, shape index: {}]
  %s4 = inlined_call_operand.hbm [shape: bf16[32,128], index: 4, kind: input, shape index: {}]
  %s5 = inlined_call_operand.hbm [shape: f32[1,128], index: 5, kind: input, shape index: {}]
  %s6 = inlined_call_operand.hbm [shape: bf16[256,256], index: 6, kind: input, shape index: {}]
  %s7 = inlined_call_operand.hbm [shape: f32[1,256], index: 7, kind: input, shape index: {}]
  %s8 = inlined_call_operand.hbm [shape: bf16[256,256], index: 8, kind: input, shape index: {}]
  %s9 = inlined_call_operand.hbm [shape: f32[1,256], index: 9, kind: input, shape index: {}]
  %s10 = inlined_call_operand.hbm [shape: bf16[256,128], index: 10, kind: input, shape index: {}]
  %s11 = inlined_call_operand.hbm [shape: f32[1,128], index: 11, kind: input, shape index: {}]
  %s12 = inlined_call_operand.hbm [shape: bf16[128,128], index: 12, kind: input, shape index: {}]
  %s13 = inlined_call_operand.hbm [shape: f32[1,128], index: 13, kind: input, shape index: {}]
  %s14 = inlined_call_operand.hbm [shape: bf16[128,128], index: 14, kind: input, shape index: {}]
  %s15 = inlined_call_operand.hbm [shape: f32[1,128], index: 15, kind: input, shape index: {}]
  %s16 = inlined_call_operand.hbm [shape: f32[16,128], index: 16, kind: output, shape index: {}]
  %s17 = sld [smem:[#allocation0]]
  $region138: #{tpu_custom_call.1} parent=0
    _
  %s19 = ssub.s32 1, %s17
  %s20 = scalar_select 0, %s19, %s17
  $region1: #{tpu_custom_call.1} parent=0
    #allocation2 [shape = 'u8[8192]{0}', space=vmem, size = 0x2000, scoped, tag = 'input window, operand 0, single buffered']
    #allocation3 [shape = 's32[1]{0}', space=sflag, size = 0x4, scoped, tag = 'scoped memory for tpu_custom_call.1']
    #allocation4 [shape = 's32[1]{0}', space=sflag, size = 0x4, scoped, tag = 'scoped memory for tpu_custom_call.1']
    #allocation5 [shape = 'u8[8192]{0}', space=vmem, size = 0x2000, scoped, tag = 'input window, operand 1, single buffered']
    #allocation6 [shape = 's32[1]{0}', space=sflag, size = 0x4, scoped, tag = 'scoped memory for tpu_custom_call.1']
    #allocation7 [shape = 'u8[16384]{0}', space=vmem, size = 0x4000, scoped, tag = 'input window, operand 2, single buffered']
    #allocation8 [shape = 'u8[512]{0}', space=vmem, size = 0x400, scoped, tag = 'input window, operand 3, single buffered']
    #allocation9 [shape = 's32[1]{0}', space=sflag, size = 0x4, scoped, tag = 'scoped memory for tpu_custom_call.1']
    #allocation10 [shape = 'u8[8192]{0}', space=vmem, size = 0x2000, scoped, tag = 'input window, operand 4, single buffered']
    #allocation11 [shape = 'u8[512]{0}', space=vmem, size = 0x400, scoped, tag = 'input window, operand 5, single buffered']
    #allocation12 [shape = 's32[1]{0}', space=sflag, size = 0x4, scoped, tag = 'scoped memory for tpu_custom_call.1']
    #allocation13 [shape = 'u8[131072]{0}', space=vmem, size = 0x20000, scoped, tag = 'input window, operand 6, single buffered']
    #allocation14 [shape = 'u8[1024]{0}', space=vmem, size = 0x400, scoped, tag = 'input window, operand 7, single buffered']
    #allocation15 [shape = 's32[1]{0}', space=sflag, size = 0x4, scoped, tag = 'scoped memory for tpu_custom_call.1']
    #allocation16 [shape = 'u8[131072]{0}', space=vmem, size = 0x20000, scoped, tag = 'input window, operand 8, single buffered']
    #allocation17 [shape = 'u8[1024]{0}', space=vmem, size = 0x400, scoped, tag = 'input window, operand 9, single buffered']
    #allocation18 [shape = 's32[1]{0}', space=sflag, size = 0x4, scoped, tag = 'scoped memory for tpu_custom_call.1']
    #allocation19 [shape = 'u8[65536]{0}', space=vmem, size = 0x10000, scoped, tag = 'input window, operand 10, single buffered']
    #allocation20 [shape = 'u8[512]{0}', space=vmem, size = 0x400, scoped, tag = 'input window, operand 11, single buffered']
    #allocation21 [shape = 's32[1]{0}', space=sflag, size = 0x4, scoped, tag = 'scoped memory for tpu_custom_call.1']
    #allocation22 [shape = 'u8[32768]{0}', space=vmem, size = 0x8000, scoped, tag = 'input window, operand 12, single buffered']
    #allocation23 [shape = 'u8[512]{0}', space=vmem, size = 0x400, scoped, tag = 'input window, operand 13, single buffered']
    #allocation24 [shape = 's32[1]{0}', space=sflag, size = 0x4, scoped, tag = 'scoped memory for tpu_custom_call.1']
    #allocation25 [shape = 'u8[32768]{0}', space=vmem, size = 0x8000, scoped, tag = 'input window, operand 14, single buffered']
    #allocation26 [shape = 'u8[512]{0}', space=vmem, size = 0x400, scoped, tag = 'input window, operand 15, single buffered']
    #allocation27 [shape = 's32[1]{0}', space=sflag, size = 0x4, scoped, tag = 'scoped memory for tpu_custom_call.1']
    #allocation28 [shape = 'u8[8192]{0}', space=vmem, size = 0x2000, scoped, tag = 'output window, operand 0, single buffered']
    %21 = vsyncpa [#allocation3], 0
    %22 = vsyncpa [#allocation6], 0
    %23 = vsyncpa [#allocation9], 0
    %24 = vsyncpa [#allocation12], 0
    %25 = vsyncpa [#allocation15], 0
    %26 = vsyncpa [#allocation18], 0
    %27 = vsyncpa [#allocation21], 0
    %28 = vsyncpa [#allocation24], 0
    %29 = vsyncpa [#allocation27], 0
    %30 = vsyncpa [#allocation4], 0
    // Predicated region
    $region2: #{tpu_custom_call.1} parent=1 // pred_check
      _
    $region3: #{tpu_custom_call.1} parent=1 // pred_check_branch
      %32 = sbr.rel (0) target = $region5
    $region4: #{tpu_custom_call.1} parent=1 // pred_region
      %s34 = ssub.s32 256, 256
      %35 = vsyncadd [#allocation3], %s34
      %s36 = sshll.u32 [#allocation2], 4
      %s37 = int_to_ptr.vmem [resolvable:$true] %s36
      %42 = dma.hbm_to_vmem [thread:$0]  %s0, 256, %s37, [#allocation3], 128, 128, 8
    $region5: #{tpu_custom_call.1} parent=1 // pred_fallthru
      _
    // Predicated region
    $region6: #{tpu_custom_call.1} parent=1 // pred_check
      _
    $region7: #{tpu_custom_call.1} parent=1 // pred_check_branch
      %44 = sbr.rel (0) target = $region9
    $region8: #{tpu_custom_call.1} parent=1 // pred_region
      %s46 = ssub.s32 256, 256
      %47 = vsyncadd [#allocation6], %s46
      %s48 = sshll.u32 [#allocation5], 4
      %s49 = int_to_ptr.vmem [resolvable:$true] %s48
      %54 = dma.hbm_to_vmem [thread:$0]  %s1, 256, %s49, [#allocation6], 128, 128, 8
    $region9: #{tpu_custom_call.1} parent=1 // pred_fallthru
      _
    // Predicated region
    $region10: #{tpu_custom_call.1} parent=1 // pred_check
      _
    $region11: #{tpu_custom_call.1} parent=1 // pred_check_branch
      %56 = sbr.rel (0) target = $region13
    $region12: #{tpu_custom_call.1} parent=1 // pred_region
      %s58 = ssub.s32 512, 512
      %59 = vsyncadd [#allocation6], %s58
      %s60 = sshll.u32 [#allocation7], 4
      %s61 = int_to_ptr.vmem [resolvable:$true] %s60
      %66 = dma.hbm_to_vmem [thread:$0]  %s2, 512, %s61, [#allocation6], 64, 64, 4
    $region13: #{tpu_custom_call.1} parent=1 // pred_fallthru
      _
    // Predicated region
    $region14: #{tpu_custom_call.1} parent=1 // pred_check
      _
    $region15: #{tpu_custom_call.1} parent=1 // pred_check_branch
      %68 = sbr.rel (0) target = $region17
    $region16: #{tpu_custom_call.1} parent=1 // pred_region
      %s70 = ssub.s32 16, 16
      %71 = vsyncadd [#allocation9], %s70
      %s73 = sshll.u32 [#allocation8], 4
      %s74 = int_to_ptr.vmem [resolvable:$true] %s73
      %76 = dma.hbm_to_vmem [thread:$0]  %s3, 16, %s74, [#allocation9]
    $region17: #{tpu_custom_call.1} parent=1 // pred_fallthru
      _
    // Predicated region
    $region18: #{tpu_custom_call.1} parent=1 // pred_check
      _
    $region19: #{tpu_custom_call.1} parent=1 // pred_check_branch
      %78 = sbr.rel (0) target = $region21
    $region20: #{tpu_custom_call.1} parent=1 // pred_region
      %s80 = ssub.s32 256, 256
      %81 = vsyncadd [#allocation9], %s80
      %s82 = sshll.u32 [#allocation10], 4
      %s83 = int_to_ptr.vmem [resolvable:$true] %s82
      %88 = dma.hbm_to_vmem [thread:$0]  %s4, 256, %s83, [#allocation9], 64, 64, 4
    $region21: #{tpu_custom_call.1} parent=1 // pred_fallthru
      _
    // Predicated region
    $region22: #{tpu_custom_call.1} parent=1 // pred_check
      _
    $region23: #{tpu_custom_call.1} parent=1 // pred_check_branch
      %90 = sbr.rel (0) target = $region25
    $region24: #{tpu_custom_call.1} parent=1 // pred_region
      %s92 = ssub.s32 16, 16
      %93 = vsyncadd [#allocation12], %s92
      %s95 = sshll.u32 [#allocation11], 4
      %s96 = int_to_ptr.vmem [resolvable:$true] %s95
      %98 = dma.hbm_to_vmem [thread:$0]  %s5, 16, %s96, [#allocation12]
    $region25: #{tpu_custom_call.1} parent=1 // pred_fallthru
      _
    // Predicated region
    $region26: #{tpu_custom_call.1} parent=1 // pred_check
      _
    $region27: #{tpu_custom_call.1} parent=1 // pred_check_branch
      %100 = sbr.rel (0) target = $region29
    $region28: #{tpu_custom_call.1} parent=1 // pred_region
      %s102 = ssub.s32 4096, 4096
      %103 = vsyncadd [#allocation12], %s102
      %s104 = sshll.u32 [#allocation13], 4
      %s105 = int_to_ptr.vmem [resolvable:$true] %s104
      %110 = dma.hbm_to_vmem [thread:$0]  %s6, 4096, %s105, [#allocation12], 128, 128, 8
    $region29: #{tpu_custom_call.1} parent=1 // pred_fallthru
      _
    // Predicated region
    $region30: #{tpu_custom_call.1} parent=1 // pred_check
      _
    $region31: #{tpu_custom_call.1} parent=1 // pred_check_branch
      %112 = sbr.rel (0) target = $region33
    $region32: #{tpu_custom_call.1} parent=1 // pred_region
      %s114 = ssub.s32 32, 32
      %115 = vsyncadd [#allocation15], %s114
      %s117 = sshll.u32 [#allocation14], 4
      %s118 = int_to_ptr.vmem [resolvable:$true] %s117
      %120 = dma.hbm_to_vmem [thread:$0]  %s7, 32, %s118, [#allocation15]
    $region33: #{tpu_custom_call.1} parent=1 // pred_fallthru
      _
    // Predicated region
    $region34: #{tpu_custom_call.1} parent=1 // pred_check
      _
    $region35: #{tpu_custom_call.1} parent=1 // pred_check_branch
      %122 = sbr.rel (0) target = $region37
    $region36: #{tpu_custom_call.1} parent=1 // pred_region
      %s124 = ssub.s32 4096, 4096
      %125 = vsyncadd [#allocation15], %s124
      %s126 = sshll.u32 [#allocation16], 4
      %s127 = int_to_ptr.vmem [resolvable:$true] %s126
      %132 = dma.hbm_to_vmem [thread:$0]  %s8, 4096, %s127, [#allocation15], 128, 128, 8
    $region37: #{tpu_custom_call.1} parent=1 // pred_fallthru
      _
    // Predicated region
    $region38: #{tpu_custom_call.1} parent=1 // pred_check
      _
    $region39: #{tpu_custom_call.1} parent=1 // pred_check_branch
      %134 = sbr.rel (0) target = $region41
    $region40: #{tpu_custom_call.1} parent=1 // pred_region
      %s136 = ssub.s32 32, 32
      %137 = vsyncadd [#allocation18], %s136
      %s139 = sshll.u32 [#allocation17], 4
      %s140 = int_to_ptr.vmem [resolvable:$true] %s139
      %142 = dma.hbm_to_vmem [thread:$0]  %s9, 32, %s140, [#allocation18]
    $region41: #{tpu_custom_call.1} parent=1 // pred_fallthru
      _
    // Predicated region
    $region42: #{tpu_custom_call.1} parent=1 // pred_check
      _
    $region43: #{tpu_custom_call.1} parent=1 // pred_check_branch
      %144 = sbr.rel (0) target = $region45
    $region44: #{tpu_custom_call.1} parent=1 // pred_region
      %s146 = ssub.s32 2048, 2048
      %147 = vsyncadd [#allocation18], %s146
      %s148 = sshll.u32 [#allocation19], 4
      %s149 = int_to_ptr.vmem [resolvable:$true] %s148
      %154 = dma.hbm_to_vmem [thread:$0]  %s10, 2048, %s149, [#allocation18], 64, 64, 4
    $region45: #{tpu_custom_call.1} parent=1 // pred_fallthru
      _
    // Predicated region
    $region46: #{tpu_custom_call.1} parent=1 // pred_check
      _
    $region47: #{tpu_custom_call.1} parent=1 // pred_check_branch
      %156 = sbr.rel (0) target = $region49
    $region48: #{tpu_custom_call.1} parent=1 // pred_region
      %s158 = ssub.s32 16, 16
      %159 = vsyncadd [#allocation21], %s158
      %s161 = sshll.u32 [#allocation20], 4
      %s162 = int_to_ptr.vmem [resolvable:$true] %s161
      %164 = dma.hbm_to_vmem [thread:$0]  %s11, 16, %s162, [#allocation21]
    $region49: #{tpu_custom_call.1} parent=1 // pred_fallthru
      _
    // Predicated region
    $region50: #{tpu_custom_call.1} parent=1 // pred_check
      _
    $region51: #{tpu_custom_call.1} parent=1 // pred_check_branch
      %166 = sbr.rel (0) target = $region53
    $region52: #{tpu_custom_call.1} parent=1 // pred_region
      %s168 = ssub.s32 1024, 1024
      %169 = vsyncadd [#allocation21], %s168
      %s170 = sshll.u32 [#allocation22], 4
      %s171 = int_to_ptr.vmem [resolvable:$true] %s170
      %176 = dma.hbm_to_vmem [thread:$0]  %s12, 1024, %s171, [#allocation21], 64, 64, 4
    $region53: #{tpu_custom_call.1} parent=1 // pred_fallthru
      _
    // Predicated region
    $region54: #{tpu_custom_call.1} parent=1 // pred_check
      _
    $region55: #{tpu_custom_call.1} parent=1 // pred_check_branch
      %178 = sbr.rel (0) target = $region57
    $region56: #{tpu_custom_call.1} parent=1 // pred_region
      %s180 = ssub.s32 16, 16
      %181 = vsyncadd [#allocation24], %s180
      %s183 = sshll.u32 [#allocation23], 4
      %s184 = int_to_ptr.vmem [resolvable:$true] %s183
      %186 = dma.hbm_to_vmem [thread:$0]  %s13, 16, %s184, [#allocation24]
    $region57: #{tpu_custom_call.1} parent=1 // pred_fallthru
      _
    // Predicated region
    $region58: #{tpu_custom_call.1} parent=1 // pred_check
      _
    $region59: #{tpu_custom_call.1} parent=1 // pred_check_branch
      %188 = sbr.rel (0) target = $region61
    $region60: #{tpu_custom_call.1} parent=1 // pred_region
      %s190 = ssub.s32 1024, 1024
      %191 = vsyncadd [#allocation24], %s190
      %s192 = sshll.u32 [#allocation25], 4
      %s193 = int_to_ptr.vmem [resolvable:$true] %s192
      %198 = dma.hbm_to_vmem [thread:$0]  %s14, 1024, %s193, [#allocation24], 64, 64, 4
    $region61: #{tpu_custom_call.1} parent=1 // pred_fallthru
      _
    // Predicated region
    $region62: #{tpu_custom_call.1} parent=1 // pred_check
      _
    $region63: #{tpu_custom_call.1} parent=1 // pred_check_branch
      %200 = sbr.rel (0) target = $region65
    $region64: #{tpu_custom_call.1} parent=1 // pred_region
      %s202 = ssub.s32 16, 16
      %203 = vsyncadd [#allocation27], %s202
      %s205 = sshll.u32 [#allocation26], 4
      %s206 = int_to_ptr.vmem [resolvable:$true] %s205
      %208 = dma.hbm_to_vmem [thread:$0]  %s15, 16, %s206, [#allocation27]
    $region65: #{tpu_custom_call.1} parent=1 // pred_fallthru
      _
    // Predicated region
    $region66: #{tpu_custom_call.1} parent=1 // pred_check
      _
    $region67: #{tpu_custom_call.1} parent=1 // pred_check_branch
      %210 = sbr.rel (0) target = $region69
    $region68: #{tpu_custom_call.1} parent=1 // pred_region
      %211 = dma.done [#allocation3], 256
    $region69: #{tpu_custom_call.1} parent=1 // pred_fallthru
      _
    // Predicated region
    $region70: #{tpu_custom_call.1} parent=1 // pred_check
      _
    $region71: #{tpu_custom_call.1} parent=1 // pred_check_branch
      %213 = sbr.rel (0) target = $region73
    $region72: #{tpu_custom_call.1} parent=1 // pred_region
      %214 = dma.done [#allocation6], 256
    $region73: #{tpu_custom_call.1} parent=1 // pred_fallthru
      _
    // Predicated region
    $region74: #{tpu_custom_call.1} parent=1 // pred_check
      _
    $region75: #{tpu_custom_call.1} parent=1 // pred_check_branch
      %216 = sbr.rel (0) target = $region77
    $region76: #{tpu_custom_call.1} parent=1 // pred_region
      %217 = dma.done [#allocation6], 512
    $region77: #{tpu_custom_call.1} parent=1 // pred_fallthru
      _
    // Predicated region
    $region78: #{tpu_custom_call.1} parent=1 // pred_check
      _
    $region79: #{tpu_custom_call.1} parent=1 // pred_check_branch
      %219 = sbr.rel (0) target = $region81
    $region80: #{tpu_custom_call.1} parent=1 // pred_region
      %220 = dma.done [#allocation9], 16
    $region81: #{tpu_custom_call.1} parent=1 // pred_fallthru
      _
    // Predicated region
    $region82: #{tpu_custom_call.1} parent=1 // pred_check
      _
    $region83: #{tpu_custom_call.1} parent=1 // pred_check_branch
      %222 = sbr.rel (0) target = $region85
    $region84: #{tpu_custom_call.1} parent=1 // pred_region
      %223 = dma.done [#allocation9], 256
    $region85: #{tpu_custom_call.1} parent=1 // pred_fallthru
      _
    // Predicated region
    $region86: #{tpu_custom_call.1} parent=1 // pred_check
      _
    $region87: #{tpu_custom_call.1} parent=1 // pred_check_branch
      %225 = sbr.rel (0) target = $region89
    $region88: #{tpu_custom_call.1} parent=1 // pred_region
      %226 = dma.done [#allocation12], 16
    $region89: #{tpu_custom_call.1} parent=1 // pred_fallthru
      _
    // Predicated region
    $region90: #{tpu_custom_call.1} parent=1 // pred_check
      _
    $region91: #{tpu_custom_call.1} parent=1 // pred_check_branch
      %228 = sbr.rel (0) target = $region93
    $region92: #{tpu_custom_call.1} parent=1 // pred_region
      %229 = dma.done [#allocation12], 4096
    $region93: #{tpu_custom_call.1} parent=1 // pred_fallthru
      _
    // Predicated region
    $region94: #{tpu_custom_call.1} parent=1 // pred_check
      _
    $region95: #{tpu_custom_call.1} parent=1 // pred_check_branch
      %231 = sbr.rel (0) target = $region97
    $region96: #{tpu_custom_call.1} parent=1 // pred_region
      %232 = dma.done [#allocation15], 32
    $region97: #{tpu_custom_call.1} parent=1 // pred_fallthru
      _
    // Predicated region
    $region98: #{tpu_custom_call.1} parent=1 // pred_check
      _
    $region99: #{tpu_custom_call.1} parent=1 // pred_check_branch
      %234 = sbr.rel (0) target = $region101
    $region100: #{tpu_custom_call.1} parent=1 // pred_region
      %235 = dma.done [#allocation15], 4096
    $region101: #{tpu_custom_call.1} parent=1 // pred_fallthru
      _
    // Predicated region
    $region102: #{tpu_custom_call.1} parent=1 // pred_check
      _
    $region103: #{tpu_custom_call.1} parent=1 // pred_check_branch
      %237 = sbr.rel (0) target = $region105
    $region104: #{tpu_custom_call.1} parent=1 // pred_region
      %238 = dma.done [#allocation18], 32
    $region105: #{tpu_custom_call.1} parent=1 // pred_fallthru
      _
    // Predicated region
    $region106: #{tpu_custom_call.1} parent=1 // pred_check
      _
    $region107: #{tpu_custom_call.1} parent=1 // pred_check_branch
      %240 = sbr.rel (0) target = $region109
    $region108: #{tpu_custom_call.1} parent=1 // pred_region
      %241 = dma.done [#allocation18], 2048
    $region109: #{tpu_custom_call.1} parent=1 // pred_fallthru
      _
    // Predicated region
    $region110: #{tpu_custom_call.1} parent=1 // pred_check
      _
    $region111: #{tpu_custom_call.1} parent=1 // pred_check_branch
      %243 = sbr.rel (0) target = $region113
    $region112: #{tpu_custom_call.1} parent=1 // pred_region
      %244 = dma.done [#allocation21], 16
    $region113: #{tpu_custom_call.1} parent=1 // pred_fallthru
      _
    // Predicated region
    $region114: #{tpu_custom_call.1} parent=1 // pred_check
      _
    $region115: #{tpu_custom_call.1} parent=1 // pred_check_branch
      %246 = sbr.rel (0) target = $region117
    $region116: #{tpu_custom_call.1} parent=1 // pred_region
      %247 = dma.done [#allocation21], 1024
    $region117: #{tpu_custom_call.1} parent=1 // pred_fallthru
      _
    // Predicated region
    $region118: #{tpu_custom_call.1} parent=1 // pred_check
      _
    $region119: #{tpu_custom_call.1} parent=1 // pred_check_branch
      %249 = sbr.rel (0) target = $region121
    $region120: #{tpu_custom_call.1} parent=1 // pred_region
      %250 = dma.done [#allocation24], 16
    $region121: #{tpu_custom_call.1} parent=1 // pred_fallthru
      _
    // Predicated region
    $region122: #{tpu_custom_call.1} parent=1 // pred_check
      _
    $region123: #{tpu_custom_call.1} parent=1 // pred_check_branch
      %252 = sbr.rel (0) target = $region125
    $region124: #{tpu_custom_call.1} parent=1 // pred_region
      %253 = dma.done [#allocation24], 1024
    $region125: #{tpu_custom_call.1} parent=1 // pred_fallthru
      _
    // Predicated region
    $region126: #{tpu_custom_call.1} parent=1 // pred_check
      _
    $region127: #{tpu_custom_call.1} parent=1 // pred_check_branch
      %255 = sbr.rel (0) target = $region129
    $region128: #{tpu_custom_call.1} parent=1 // pred_region
      %256 = dma.done [#allocation27], 16
    $region129: #{tpu_custom_call.1} parent=1 // pred_fallthru
      _
    %v258 = vld [vmem:[#allocation2] sm:$0xff]
    %v259 = vld [vmem:[#allocation2 + $0x8] sm:$0xff]
    %v260 = vpack.c.bf16 %v259, %v258
    %v261 = vld [vmem:[#allocation5] sm:$0xff]
    %v262 = vld [vmem:[#allocation5 + $0x8] sm:$0xff]
    %v263 = vpack.c.bf16 %v262, %v261
    %v264 = vld [vmem:[#allocation7] sm:$0xf]
    %v265 = vld [vmem:[#allocation7 + $0x4] sm:$0xf]
    %v266 = vld [vmem:[#allocation7 + $0x8] sm:$0xf]
    %v267 = vld [vmem:[#allocation7 + $0xc] sm:$0xf]
    %v268 = vld [vmem:[#allocation7 + $0x10] sm:$0xf]
    %v269 = vld [vmem:[#allocation7 + $0x14] sm:$0xf]
    %v270 = vld [vmem:[#allocation7 + $0x18] sm:$0xf]
    %v271 = vld [vmem:[#allocation7 + $0x1c] sm:$0xf]
    %v272 = vld [vmem:[#allocation8] sm:$0x1]
    %v274 = vlaneseq
    %v275 = vshrl.u32 %v274, 7
    %v276 = vsub.s32 0, %v275
    %v277 = vrot.slane %v272, %v276
    %v287 = vunpack.c.l.b16 %v264
    %v288 = vunpack.c.l.b16 %v265
    %v289 = vunpack.c.l.b16 %v266
    %v290 = vunpack.c.l.b16 %v267
    %v291 = vunpack.c.l.b16 %v268
    %v292 = vunpack.c.l.b16 %v269
    %v293 = vunpack.c.l.b16 %v270
    %v294 = vunpack.c.l.b16 %v271
    %v295 = vpack.c.b16 %v288, %v287
    %v296 = vpack.c.b16 %v290, %v289
    %v297 = vpack.c.b16 %v292, %v291
    %v298 = vpack.c.b16 %v294, %v293
    %vm303 = vcmask 523264
    %v305 = vsel %vm303, %v260, 0
    %307 = vmatprep.subr.bf16.mxu0 0
    %308 = vmatpush1.bf16.msra.mxu0 %v295
    %309 = vmatprep.subr.bf16.mxu0 0
    %310 = vmatpush1.bf16.msra.mxu0 %v296
    %311 = vmatprep.subr.bf16.mxu0 0
    %312 = vmatpush1.bf16.msra.mxu0 %v297
    %313 = vmatprep.subr.bf16.mxu0 0
    %314 = vmatpush1.bf16.msra.mxu0 %v298
    %315 = vmatprep.subr.bf16.mxu0 0
    %316 = vmatpush1.bf16.msra.mxu0 0
    %317 = vmatprep.subr.bf16.mxu0 0
    %318 = vmatpush1.bf16.msra.mxu0 0
    %319 = vmatprep.subr.bf16.mxu0 0
    %320 = vmatpush1.bf16.msra.mxu0 0
    %321 = vmatprep.subr.bf16.mxu0 0
    %322 = vmatpush1.bf16.msra.mxu0 0
    %323 = vmatprep.subr.bf16.mxu0 0
    %324 = vmatpush1.bf16.msra.mxu0 0
    %325 = vmatprep.subr.bf16.mxu0 0
    %326 = vmatpush1.bf16.msra.mxu0 0
    %327 = vmatprep.subr.bf16.mxu0 0
    %328 = vmatpush1.bf16.msra.mxu0 0
    %329 = vmatprep.subr.bf16.mxu0 0
    %330 = vmatpush1.bf16.msra.mxu0 0
    %331 = vmatprep.subr.bf16.mxu0 0
    %332 = vmatpush1.bf16.msra.mxu0 0
    %333 = vmatprep.subr.bf16.mxu0 0
    %334 = vmatpush1.bf16.msra.mxu0 0
    %335 = vmatprep.subr.bf16.mxu0 0
    %336 = vmatpush1.bf16.msra.mxu0 0
    %337 = vmatprep.subr.bf16.mxu0 0
    %338 = vmatpush1.bf16.msra.mxu0 0
    %339 = vmatprep.mubr.bf16.mxu0 0
    %340 = vmatmul.mubr.bf16.gmra.mrb[0].mxu0 %v305
    %v341 = vpop.f32.mrb[0].mxu0
    %v342 = vadd.f32 %v277, %v341
    %v343 = vpop.f32.mrb[0].mxu0
    %v344 = vpop.f32.mrb[0].mxu0
    %v345 = vadd.f32 %v277, %v344
    %v346 = vpop.f32.mrb[0].mxu0
    %347 = vdwg.mxu0
    %v348 = vmax.f32 %v342, 0.0
    %v349 = vmax.f32 %v345, 0.0
    %v350 = vpack.c.bf16 %v349, %v348
    %v351 = vld [vmem:[#allocation10] sm:$0xf]
    %v352 = vld [vmem:[#allocation10 + $0x4] sm:$0xf]
    %v353 = vld [vmem:[#allocation10 + $0x8] sm:$0xf]
    %v354 = vld [vmem:[#allocation10 + $0xc] sm:$0xf]
    %v355 = vld [vmem:[#allocation11] sm:$0x1]
    %v357 = vlaneseq
    %v358 = vshrl.u32 %v357, 7
    %v359 = vsub.s32 0, %v358
    %v360 = vrot.slane %v355, %v359
    %v366 = vunpack.c.l.b16 %v351
    %v367 = vunpack.c.l.b16 %v352
    %v368 = vunpack.c.l.b16 %v353
    %v369 = vunpack.c.l.b16 %v354
    %v370 = vpack.c.b16 %v367, %v366
    %v371 = vpack.c.b16 %v369, %v368
    %vm374 = vcmask 261120
    %v376 = vsel %vm374, %v263, 0
    %378 = vmatprep.subr.bf16.mxu0 0
    %379 = vmatpush1.bf16.msra.mxu0 %v370
    %380 = vmatprep.subr.bf16.mxu0 0
    %381 = vmatpush1.bf16.msra.mxu0 %v371
    %382 = vmatprep.subr.bf16.mxu0 0
    %383 = vmatpush1.bf16.msra.mxu0 0
    %384 = vmatprep.subr.bf16.mxu0 0
    %385 = vmatpush1.bf16.msra.mxu0 0
    %386 = vmatprep.subr.bf16.mxu0 0
    %387 = vmatpush1.bf16.msra.mxu0 0
    %388 = vmatprep.subr.bf16.mxu0 0
    %389 = vmatpush1.bf16.msra.mxu0 0
    %390 = vmatprep.subr.bf16.mxu0 0
    %391 = vmatpush1.bf16.msra.mxu0 0
    %392 = vmatprep.subr.bf16.mxu0 0
    %393 = vmatpush1.bf16.msra.mxu0 0
    %394 = vmatprep.subr.bf16.mxu0 0
    %395 = vmatpush1.bf16.msra.mxu0 0
    %396 = vmatprep.subr.bf16.mxu0 0
    %397 = vmatpush1.bf16.msra.mxu0 0
    %398 = vmatprep.subr.bf16.mxu0 0
    %399 = vmatpush1.bf16.msra.mxu0 0
    %400 = vmatprep.subr.bf16.mxu0 0
    %401 = vmatpush1.bf16.msra.mxu0 0
    %402 = vmatprep.subr.bf16.mxu0 0
    %403 = vmatpush1.bf16.msra.mxu0 0
    %404 = vmatprep.subr.bf16.mxu0 0
    %405 = vmatpush1.bf16.msra.mxu0 0
    %406 = vmatprep.subr.bf16.mxu0 0
    %407 = vmatpush1.bf16.msra.mxu0 0
    %408 = vmatprep.subr.bf16.mxu0 0
    %409 = vmatpush1.bf16.msra.mxu0 0
    %410 = vmatprep.mubr.bf16.mxu0 0
    %411 = vmatmul.mubr.bf16.gmra.mrb[0].mxu0 %v376
    %v412 = vpop.f32.mrb[0].mxu0
    %v413 = vadd.f32 %v360, %v412
    %v414 = vpop.f32.mrb[0].mxu0
    %v415 = vpop.f32.mrb[0].mxu0
    %v416 = vadd.f32 %v360, %v415
    %v417 = vpop.f32.mrb[0].mxu0
    %418 = vdwg.mxu0
    %v419 = vmax.f32 %v413, 0.0
    %v420 = vmax.f32 %v416, 0.0
    %v421 = vpack.c.bf16 %v420, %v419
    %v422 = vld [vmem:[#allocation13] sm:$0xff]
    %v423 = vld [vmem:[#allocation13 + $0x8] sm:$0xff]
    %v424 = vld [vmem:[#allocation13 + $0x10] sm:$0xff]
    %v425 = vld [vmem:[#allocation13 + $0x18] sm:$0xff]
    %v426 = vld [vmem:[#allocation13 + $0x20] sm:$0xff]
    %v427 = vld [vmem:[#allocation13 + $0x28] sm:$0xff]
    %v428 = vld [vmem:[#allocation13 + $0x30] sm:$0xff]
    %v429 = vld [vmem:[#allocation13 + $0x38] sm:$0xff]
    %v430 = vld [vmem:[#allocation13 + $0x40] sm:$0xff]
    %v431 = vld [vmem:[#allocation13 + $0x48] sm:$0xff]
    %v432 = vld [vmem:[#allocation13 + $0x50] sm:$0xff]
    %v433 = vld [vmem:[#allocation13 + $0x58] sm:$0xff]
    %v434 = vld [vmem:[#allocation13 + $0x60] sm:$0xff]
    %v435 = vld [vmem:[#allocation13 + $0x68] sm:$0xff]
    %v436 = vld [vmem:[#allocation13 + $0x70] sm:$0xff]
    %v437 = vld [vmem:[#allocation13 + $0x78] sm:$0xff]
    %v438 = vld [vmem:[#allocation13 + $0x80] sm:$0xff]
    %v439 = vld [vmem:[#allocation13 + $0x88] sm:$0xff]
    %v440 = vld [vmem:[#allocation13 + $0x90] sm:$0xff]
    %v441 = vld [vmem:[#allocation13 + $0x98] sm:$0xff]
    %v442 = vld [vmem:[#allocation13 + $0xa0] sm:$0xff]
    %v443 = vld [vmem:[#allocation13 + $0xa8] sm:$0xff]
    %v444 = vld [vmem:[#allocation13 + $0xb0] sm:$0xff]
    %v445 = vld [vmem:[#allocation13 + $0xb8] sm:$0xff]
    %v446 = vld [vmem:[#allocation13 + $0xc0] sm:$0xff]
    %v447 = vld [vmem:[#allocation13 + $0xc8] sm:$0xff]
    %v448 = vld [vmem:[#allocation13 + $0xd0] sm:$0xff]
    %v449 = vld [vmem:[#allocation13 + $0xd8] sm:$0xff]
    %v450 = vld [vmem:[#allocation13 + $0xe0] sm:$0xff]
    %v451 = vld [vmem:[#allocation13 + $0xe8] sm:$0xff]
    %v452 = vld [vmem:[#allocation13 + $0xf0] sm:$0xff]
    %v453 = vld [vmem:[#allocation13 + $0xf8] sm:$0xff]
    %v454 = vld [vmem:[#allocation14] sm:$0x3]
    %v456 = vlaneseq
    %v457 = vshrl.u32 %v456, 7
    %v458 = vsub.s32 0, %v457
    %v459 = vrot.slane %v454, %v458
    %v460 = vlaneseq
    %v461 = vshrl.u32 %v460, 7
    %v462 = vsub.s32 1, %v461
    %v463 = vrot.slane %v454, %v462
    %v498 = vunpack.c.l.b16 %v422
    %v499 = vunpack.c.h.b16 %v422
    %v500 = vunpack.c.l.b16 %v423
    %v501 = vunpack.c.h.b16 %v423
    %v502 = vunpack.c.l.b16 %v424
    %v503 = vunpack.c.h.b16 %v424
    %v504 = vunpack.c.l.b16 %v425
    %v505 = vunpack.c.h.b16 %v425
    %v506 = vunpack.c.l.b16 %v426
    %v507 = vunpack.c.h.b16 %v426
    %v508 = vunpack.c.l.b16 %v427
    %v509 = vunpack.c.h.b16 %v427
    %v510 = vunpack.c.l.b16 %v428
    %v511 = vunpack.c.h.b16 %v428
    %v512 = vunpack.c.l.b16 %v429
    %v513 = vunpack.c.h.b16 %v429
    %v514 = vunpack.c.l.b16 %v430
    %v515 = vunpack.c.h.b16 %v430
    %v516 = vunpack.c.l.b16 %v431
    %v517 = vunpack.c.h.b16 %v431
    %v518 = vunpack.c.l.b16 %v432
    %v519 = vunpack.c.h.b16 %v432
    %v520 = vunpack.c.l.b16 %v433
    %v521 = vunpack.c.h.b16 %v433
    %v522 = vunpack.c.l.b16 %v434
    %v523 = vunpack.c.h.b16 %v434
    %v524 = vunpack.c.l.b16 %v435
    %v525 = vunpack.c.h.b16 %v435
    %v526 = vunpack.c.l.b16 %v436
    %v527 = vunpack.c.h.b16 %v436
    %v528 = vunpack.c.l.b16 %v437
    %v529 = vunpack.c.h.b16 %v437
    %v530 = vunpack.c.l.b16 %v438
    %v531 = vunpack.c.h.b16 %v438
    %v532 = vunpack.c.l.b16 %v439
    %v533 = vunpack.c.h.b16 %v439
    %v534 = vunpack.c.l.b16 %v440
    %v535 = vunpack.c.h.b16 %v440
    %v536 = vunpack.c.l.b16 %v441
    %v537 = vunpack.c.h.b16 %v441
    %v538 = vunpack.c.l.b16 %v442
    %v539 = vunpack.c.h.b16 %v442
    %v540 = vunpack.c.l.b16 %v443
    %v541 = vunpack.c.h.b16 %v443
    %v542 = vunpack.c.l.b16 %v444
    %v543 = vunpack.c.h.b16 %v444
    %v544 = vunpack.c.l.b16 %v445
    %v545 = vunpack.c.h.b16 %v445
    %v546 = vunpack.c.l.b16 %v446
    %v547 = vunpack.c.h.b16 %v446
    %v548 = vunpack.c.l.b16 %v447
    %v549 = vunpack.c.h.b16 %v447
    %v550 = vunpack.c.l.b16 %v448
    %v551 = vunpack.c.h.b16 %v448
    %v552 = vunpack.c.l.b16 %v449
    %v553 = vunpack.c.h.b16 %v449
    %v554 = vunpack.c.l.b16 %v450
    %v555 = vunpack.c.h.b16 %v450
    %v556 = vunpack.c.l.b16 %v451
    %v557 = vunpack.c.h.b16 %v451
    %v558 = vunpack.c.l.b16 %v452
    %v559 = vunpack.c.h.b16 %v452
    %v560 = vunpack.c.l.b16 %v453
    %v561 = vunpack.c.h.b16 %v453
    %v562 = vpack.c.b16 %v500, %v498
    %v563 = vpack.c.b16 %v501, %v499
    %v564 = vpack.c.b16 %v504, %v502
    %v565 = vpack.c.b16 %v505, %v503
    %v566 = vpack.c.b16 %v508, %v506
    %v567 = vpack.c.b16 %v509, %v507
    %v568 = vpack.c.b16 %v512, %v510
    %v569 = vpack.c.b16 %v513, %v511
    %v570 = vpack.c.b16 %v516, %v514
    %v571 = vpack.c.b16 %v517, %v515
    %v572 = vpack.c.b16 %v520, %v518
    %v573 = vpack.c.b16 %v521, %v519
    %v574 = vpack.c.b16 %v524, %v522
    %v575 = vpack.c.b16 %v525, %v523
    %v576 = vpack.c.b16 %v528, %v526
    %v577 = vpack.c.b16 %v529, %v527
    %v578 = vpack.c.b16 %v532, %v530
    %v579 = vpack.c.b16 %v533, %v531
    %v580 = vpack.c.b16 %v536, %v534
    %v581 = vpack.c.b16 %v537, %v535
    %v582 = vpack.c.b16 %v540, %v538
    %v583 = vpack.c.b16 %v541, %v539
    %v584 = vpack.c.b16 %v544, %v542
    %v585 = vpack.c.b16 %v545, %v543
    %v586 = vpack.c.b16 %v548, %v546
    %v587 = vpack.c.b16 %v549, %v547
    %v588 = vpack.c.b16 %v552, %v550
    %v589 = vpack.c.b16 %v553, %v551
    %v590 = vpack.c.b16 %v556, %v554
    %v591 = vpack.c.b16 %v557, %v555
    %v592 = vpack.c.b16 %v560, %v558
    %v593 = vpack.c.b16 %v561, %v559
    %626 = vmatprep.subr.bf16.mxu0 %v563
    %627 = vmatpush1.bf16.msra.mxu0 %v562
    %628 = vmatprep.subr.bf16.mxu0 %v565
    %629 = vmatpush1.bf16.msra.mxu0 %v564
    %630 = vmatprep.subr.bf16.mxu0 %v567
    %631 = vmatpush1.bf16.msra.mxu0 %v566
    %632 = vmatprep.subr.bf16.mxu0 %v569
    %633 = vmatpush1.bf16.msra.mxu0 %v568
    %634 = vmatprep.subr.bf16.mxu0 %v571
    %635 = vmatpush1.bf16.msra.mxu0 %v570
    %636 = vmatprep.subr.bf16.mxu0 %v573
    %637 = vmatpush1.bf16.msra.mxu0 %v572
    %638 = vmatprep.subr.bf16.mxu0 %v575
    %639 = vmatpush1.bf16.msra.mxu0 %v574
    %640 = vmatprep.subr.bf16.mxu0 %v577
    %641 = vmatpush1.bf16.msra.mxu0 %v576
    %642 = vmatprep.subr.bf16.mxu0 %v579
    %643 = vmatpush1.bf16.msra.mxu0 %v578
    %644 = vmatprep.subr.bf16.mxu0 %v581
    %645 = vmatpush1.bf16.msra.mxu0 %v580
    %646 = vmatprep.subr.bf16.mxu0 %v583
    %647 = vmatpush1.bf16.msra.mxu0 %v582
    %648 = vmatprep.subr.bf16.mxu0 %v585
    %649 = vmatpush1.bf16.msra.mxu0 %v584
    %650 = vmatprep.subr.bf16.mxu0 %v587
    %651 = vmatpush1.bf16.msra.mxu0 %v586
    %652 = vmatprep.subr.bf16.mxu0 %v589
    %653 = vmatpush1.bf16.msra.mxu0 %v588
    %654 = vmatprep.subr.bf16.mxu0 %v591
    %655 = vmatpush1.bf16.msra.mxu0 %v590
    %656 = vmatprep.subr.bf16.mxu0 %v593
    %657 = vmatpush1.bf16.msra.mxu0 %v592
    %658 = vmatprep.mubr.bf16.mxu0 %v421
    %659 = vmatmul.mubr.bf16.gmra.mrb[0].mxu0 %v350
    %v660 = vpop.f32.mrb[0].mxu0
    %v661 = vadd.f32 %v459, %v660
    %v662 = vpop.f32.mrb[0].mxu0
    %v663 = vadd.f32 %v463, %v662
    %v664 = vpop.f32.mrb[0].mxu0
    %v665 = vadd.f32 %v459, %v664
    %v666 = vpop.f32.mrb[0].mxu0
    %v667 = vadd.f32 %v463, %v666
    %668 = vdwg.mxu0
    %v669 = vmax.f32 %v661, 0.0
    %v670 = vmax.f32 %v663, 0.0
    %v671 = vmax.f32 %v665, 0.0
    %v672 = vmax.f32 %v667, 0.0
    %v673 = vpack.c.bf16 %v671, %v669
    %v674 = vpack.c.bf16 %v672, %v670
    %v675 = vld [vmem:[#allocation16] sm:$0xff]
    %v676 = vld [vmem:[#allocation16 + $0x8] sm:$0xff]
    %v677 = vld [vmem:[#allocation16 + $0x10] sm:$0xff]
    %v678 = vld [vmem:[#allocation16 + $0x18] sm:$0xff]
    %v679 = vld [vmem:[#allocation16 + $0x20] sm:$0xff]
    %v680 = vld [vmem:[#allocation16 + $0x28] sm:$0xff]
    %v681 = vld [vmem:[#allocation16 + $0x30] sm:$0xff]
    %v682 = vld [vmem:[#allocation16 + $0x38] sm:$0xff]
    %v683 = vld [vmem:[#allocation16 + $0x40] sm:$0xff]
    %v684 = vld [vmem:[#allocation16 + $0x48] sm:$0xff]
    %v685 = vld [vmem:[#allocation16 + $0x50] sm:$0xff]
    %v686 = vld [vmem:[#allocation16 + $0x58] sm:$0xff]
    %v687 = vld [vmem:[#allocation16 + $0x60] sm:$0xff]
    %v688 = vld [vmem:[#allocation16 + $0x68] sm:$0xff]
    %v689 = vld [vmem:[#allocation16 + $0x70] sm:$0xff]
    %v690 = vld [vmem:[#allocation16 + $0x78] sm:$0xff]
    %v691 = vld [vmem:[#allocation16 + $0x80] sm:$0xff]
    %v692 = vld [vmem:[#allocation16 + $0x88] sm:$0xff]
    %v693 = vld [vmem:[#allocation16 + $0x90] sm:$0xff]
    %v694 = vld [vmem:[#allocation16 + $0x98] sm:$0xff]
    %v695 = vld [vmem:[#allocation16 + $0xa0] sm:$0xff]
    %v696 = vld [vmem:[#allocation16 + $0xa8] sm:$0xff]
    %v697 = vld [vmem:[#allocation16 + $0xb0] sm:$0xff]
    %v698 = vld [vmem:[#allocation16 + $0xb8] sm:$0xff]
    %v699 = vld [vmem:[#allocation16 + $0xc0] sm:$0xff]
    %v700 = vld [vmem:[#allocation16 + $0xc8] sm:$0xff]
    %v701 = vld [vmem:[#allocation16 + $0xd0] sm:$0xff]
    %v702 = vld [vmem:[#allocation16 + $0xd8] sm:$0xff]
    %v703 = vld [vmem:[#allocation16 + $0xe0] sm:$0xff]
    %v704 = vld [vmem:[#allocation16 + $0xe8] sm:$0xff]
    %v705 = vld [vmem:[#allocation16 + $0xf0] sm:$0xff]
    %v706 = vld [vmem:[#allocation16 + $0xf8] sm:$0xff]
    %v707 = vld [vmem:[#allocation17] sm:$0x3]
    %v709 = vlaneseq
    %v710 = vshrl.u32 %v709, 7
    %v711 = vsub.s32 0, %v710
    %v712 = vrot.slane %v707, %v711
    %v713 = vlaneseq
    %v714 = vshrl.u32 %v713, 7
    %v715 = vsub.s32 1, %v714
    %v716 = vrot.slane %v707, %v715
    %v751 = vunpack.c.l.b16 %v675
    %v752 = vunpack.c.h.b16 %v675
    %v753 = vunpack.c.l.b16 %v676
    %v754 = vunpack.c.h.b16 %v676
    %v755 = vunpack.c.l.b16 %v677
    %v756 = vunpack.c.h.b16 %v677
    %v757 = vunpack.c.l.b16 %v678
    %v758 = vunpack.c.h.b16 %v678
    %v759 = vunpack.c.l.b16 %v679
    %v760 = vunpack.c.h.b16 %v679
    %v761 = vunpack.c.l.b16 %v680
    %v762 = vunpack.c.h.b16 %v680
    %v763 = vunpack.c.l.b16 %v681
    %v764 = vunpack.c.h.b16 %v681
    %v765 = vunpack.c.l.b16 %v682
    %v766 = vunpack.c.h.b16 %v682
    %v767 = vunpack.c.l.b16 %v683
    %v768 = vunpack.c.h.b16 %v683
    %v769 = vunpack.c.l.b16 %v684
    %v770 = vunpack.c.h.b16 %v684
    %v771 = vunpack.c.l.b16 %v685
    %v772 = vunpack.c.h.b16 %v685
    %v773 = vunpack.c.l.b16 %v686
    %v774 = vunpack.c.h.b16 %v686
    %v775 = vunpack.c.l.b16 %v687
    %v776 = vunpack.c.h.b16 %v687
    %v777 = vunpack.c.l.b16 %v688
    %v778 = vunpack.c.h.b16 %v688
    %v779 = vunpack.c.l.b16 %v689
    %v780 = vunpack.c.h.b16 %v689
    %v781 = vunpack.c.l.b16 %v690
    %v782 = vunpack.c.h.b16 %v690
    %v783 = vunpack.c.l.b16 %v691
    %v784 = vunpack.c.h.b16 %v691
    %v785 = vunpack.c.l.b16 %v692
    %v786 = vunpack.c.h.b16 %v692
    %v787 = vunpack.c.l.b16 %v693
    %v788 = vunpack.c.h.b16 %v693
    %v789 = vunpack.c.l.b16 %v694
    %v790 = vunpack.c.h.b16 %v694
    %v791 = vunpack.c.l.b16 %v695
    %v792 = vunpack.c.h.b16 %v695
    %v793 = vunpack.c.l.b16 %v696
    %v794 = vunpack.c.h.b16 %v696
    %v795 = vunpack.c.l.b16 %v697
    %v796 = vunpack.c.h.b16 %v697
    %v797 = vunpack.c.l.b16 %v698
    %v798 = vunpack.c.h.b16 %v698
    %v799 = vunpack.c.l.b16 %v699
    %v800 = vunpack.c.h.b16 %v699
    %v801 = vunpack.c.l.b16 %v700
    %v802 = vunpack.c.h.b16 %v700
    %v803 = vunpack.c.l.b16 %v701
    %v804 = vunpack.c.h.b16 %v701
    %v805 = vunpack.c.l.b16 %v702
    %v806 = vunpack.c.h.b16 %v702
    %v807 = vunpack.c.l.b16 %v703
    %v808 = vunpack.c.h.b16 %v703
    %v809 = vunpack.c.l.b16 %v704
    %v810 = vunpack.c.h.b16 %v704
    %v811 = vunpack.c.l.b16 %v705
    %v812 = vunpack.c.h.b16 %v705
    %v813 = vunpack.c.l.b16 %v706
    %v814 = vunpack.c.h.b16 %v706
    %v815 = vpack.c.b16 %v753, %v751
    %v816 = vpack.c.b16 %v754, %v752
    %v817 = vpack.c.b16 %v757, %v755
    %v818 = vpack.c.b16 %v758, %v756
    %v819 = vpack.c.b16 %v761, %v759
    %v820 = vpack.c.b16 %v762, %v760
    %v821 = vpack.c.b16 %v765, %v763
    %v822 = vpack.c.b16 %v766, %v764
    %v823 = vpack.c.b16 %v769, %v767
    %v824 = vpack.c.b16 %v770, %v768
    %v825 = vpack.c.b16 %v773, %v771
    %v826 = vpack.c.b16 %v774, %v772
    %v827 = vpack.c.b16 %v777, %v775
    %v828 = vpack.c.b16 %v778, %v776
    %v829 = vpack.c.b16 %v781, %v779
    %v830 = vpack.c.b16 %v782, %v780
    %v831 = vpack.c.b16 %v785, %v783
    %v832 = vpack.c.b16 %v786, %v784
    %v833 = vpack.c.b16 %v789, %v787
    %v834 = vpack.c.b16 %v790, %v788
    %v835 = vpack.c.b16 %v793, %v791
    %v836 = vpack.c.b16 %v794, %v792
    %v837 = vpack.c.b16 %v797, %v795
    %v838 = vpack.c.b16 %v798, %v796
    %v839 = vpack.c.b16 %v801, %v799
    %v840 = vpack.c.b16 %v802, %v800
    %v841 = vpack.c.b16 %v805, %v803
    %v842 = vpack.c.b16 %v806, %v804
    %v843 = vpack.c.b16 %v809, %v807
    %v844 = vpack.c.b16 %v810, %v808
    %v845 = vpack.c.b16 %v813, %v811
    %v846 = vpack.c.b16 %v814, %v812
    %879 = vmatprep.subr.bf16.mxu0 %v816
    %880 = vmatpush1.bf16.msra.mxu0 %v815
    %881 = vmatprep.subr.bf16.mxu0 %v818
    %882 = vmatpush1.bf16.msra.mxu0 %v817
    %883 = vmatprep.subr.bf16.mxu0 %v820
    %884 = vmatpush1.bf16.msra.mxu0 %v819
    %885 = vmatprep.subr.bf16.mxu0 %v822
    %886 = vmatpush1.bf16.msra.mxu0 %v821
    %887 = vmatprep.subr.bf16.mxu0 %v824
    %888 = vmatpush1.bf16.msra.mxu0 %v823
    %889 = vmatprep.subr.bf16.mxu0 %v826
    %890 = vmatpush1.bf16.msra.mxu0 %v825
    %891 = vmatprep.subr.bf16.mxu0 %v828
    %892 = vmatpush1.bf16.msra.mxu0 %v827
    %893 = vmatprep.subr.bf16.mxu0 %v830
    %894 = vmatpush1.bf16.msra.mxu0 %v829
    %895 = vmatprep.subr.bf16.mxu0 %v832
    %896 = vmatpush1.bf16.msra.mxu0 %v831
    %897 = vmatprep.subr.bf16.mxu0 %v834
    %898 = vmatpush1.bf16.msra.mxu0 %v833
    %899 = vmatprep.subr.bf16.mxu0 %v836
    %900 = vmatpush1.bf16.msra.mxu0 %v835
    %901 = vmatprep.subr.bf16.mxu0 %v838
    %902 = vmatpush1.bf16.msra.mxu0 %v837
    %903 = vmatprep.subr.bf16.mxu0 %v840
    %904 = vmatpush1.bf16.msra.mxu0 %v839
    %905 = vmatprep.subr.bf16.mxu0 %v842
    %906 = vmatpush1.bf16.msra.mxu0 %v841
    %907 = vmatprep.subr.bf16.mxu0 %v844
    %908 = vmatpush1.bf16.msra.mxu0 %v843
    %909 = vmatprep.subr.bf16.mxu0 %v846
    %910 = vmatpush1.bf16.msra.mxu0 %v845
    %911 = vmatprep.mubr.bf16.mxu0 %v674
    %912 = vmatmul.mubr.bf16.gmra.mrb[0].mxu0 %v673
    %v913 = vpop.f32.mrb[0].mxu0
    %v914 = vadd.f32 %v712, %v913
    %v915 = vpop.f32.mrb[0].mxu0
    %v916 = vadd.f32 %v716, %v915
    %v917 = vpop.f32.mrb[0].mxu0
    %v918 = vadd.f32 %v712, %v917
    %v919 = vpop.f32.mrb[0].mxu0
    %v920 = vadd.f32 %v716, %v919
    %921 = vdwg.mxu0
    %v922 = vmax.f32 %v914, 0.0
    %v923 = vmax.f32 %v916, 0.0
    %v924 = vmax.f32 %v918, 0.0
    %v925 = vmax.f32 %v920, 0.0
    %v926 = vpack.c.bf16 %v924, %v922
    %v927 = vpack.c.bf16 %v925, %v923
    %v928 = vld [vmem:[#allocation19] sm:$0xf]
    %v929 = vld [vmem:[#allocation19 + $0x4] sm:$0xf]
    %v930 = vld [vmem:[#allocation19 + $0x8] sm:$0xf]
    %v931 = vld [vmem:[#allocation19 + $0xc] sm:$0xf]
    %v932 = vld [vmem:[#allocation19 + $0x10] sm:$0xf]
    %v933 = vld [vmem:[#allocation19 + $0x14] sm:$0xf]
    %v934 = vld [vmem:[#allocation19 + $0x18] sm:$0xf]
    %v935 = vld [vmem:[#allocation19 + $0x1c] sm:$0xf]
    %v936 = vld [vmem:[#allocation19 + $0x20] sm:$0xf]
    %v937 = vld [vmem:[#allocation19 + $0x24] sm:$0xf]
    %v938 = vld [vmem:[#allocation19 + $0x28] sm:$0xf]
    %v939 = vld [vmem:[#allocation19 + $0x2c] sm:$0xf]
    %v940 = vld [vmem:[#allocation19 + $0x30] sm:$0xf]
    %v941 = vld [vmem:[#allocation19 + $0x34] sm:$0xf]
    %v942 = vld [vmem:[#allocation19 + $0x38] sm:$0xf]
    %v943 = vld [vmem:[#allocation19 + $0x3c] sm:$0xf]
    %v944 = vld [vmem:[#allocation19 + $0x40] sm:$0xf]
    %v945 = vld [vmem:[#allocation19 + $0x44] sm:$0xf]
    %v946 = vld [vmem:[#allocation19 + $0x48] sm:$0xf]
    %v947 = vld [vmem:[#allocation19 + $0x4c] sm:$0xf]
    %v948 = vld [vmem:[#allocation19 + $0x50] sm:$0xf]
    %v949 = vld [vmem:[#allocation19 + $0x54] sm:$0xf]
    %v950 = vld [vmem:[#allocation19 + $0x58] sm:$0xf]
    %v951 = vld [vmem:[#allocation19 + $0x5c] sm:$0xf]
    %v952 = vld [vmem:[#allocation19 + $0x60] sm:$0xf]
    %v953 = vld [vmem:[#allocation19 + $0x64] sm:$0xf]
    %v954 = vld [vmem:[#allocation19 + $0x68] sm:$0xf]
    %v955 = vld [vmem:[#allocation19 + $0x6c] sm:$0xf]
    %v956 = vld [vmem:[#allocation19 + $0x70] sm:$0xf]
    %v957 = vld [vmem:[#allocation19 + $0x74] sm:$0xf]
    %v958 = vld [vmem:[#allocation19 + $0x78] sm:$0xf]
    %v959 = vld [vmem:[#allocation19 + $0x7c] sm:$0xf]
    %v960 = vld [vmem:[#allocation20] sm:$0x1]
    %v962 = vlaneseq
    %v963 = vshrl.u32 %v962, 7
    %v964 = vsub.s32 0, %v963
    %v965 = vrot.slane %v960, %v964
    %v999 = vunpack.c.l.b16 %v928
    %v1000 = vunpack.c.l.b16 %v929
    %v1001 = vunpack.c.l.b16 %v930
    %v1002 = vunpack.c.l.b16 %v931
    %v1003 = vunpack.c.l.b16 %v932
    %v1004 = vunpack.c.l.b16 %v933
    %v1005 = vunpack.c.l.b16 %v934
    %v1006 = vunpack.c.l.b16 %v935
    %v1007 = vunpack.c.l.b16 %v936
    %v1008 = vunpack.c.l.b16 %v937
    %v1009 = vunpack.c.l.b16 %v938
    %v1010 = vunpack.c.l.b16 %v939
    %v1011 = vunpack.c.l.b16 %v940
    %v1012 = vunpack.c.l.b16 %v941
    %v1013 = vunpack.c.l.b16 %v942
    %v1014 = vunpack.c.l.b16 %v943
    %v1015 = vunpack.c.l.b16 %v944
    %v1016 = vunpack.c.l.b16 %v945
    %v1017 = vunpack.c.l.b16 %v946
    %v1018 = vunpack.c.l.b16 %v947
    %v1019 = vunpack.c.l.b16 %v948
    %v1020 = vunpack.c.l.b16 %v949
    %v1021 = vunpack.c.l.b16 %v950
    %v1022 = vunpack.c.l.b16 %v951
    %v1023 = vunpack.c.l.b16 %v952
    %v1024 = vunpack.c.l.b16 %v953
    %v1025 = vunpack.c.l.b16 %v954
    %v1026 = vunpack.c.l.b16 %v955
    %v1027 = vunpack.c.l.b16 %v956
    %v1028 = vunpack.c.l.b16 %v957
    %v1029 = vunpack.c.l.b16 %v958
    %v1030 = vunpack.c.l.b16 %v959
    %v1031 = vpack.c.b16 %v1000, %v999
    %v1032 = vpack.c.b16 %v1002, %v1001
    %v1033 = vpack.c.b16 %v1004, %v1003
    %v1034 = vpack.c.b16 %v1006, %v1005
    %v1035 = vpack.c.b16 %v1008, %v1007
    %v1036 = vpack.c.b16 %v1010, %v1009
    %v1037 = vpack.c.b16 %v1012, %v1011
    %v1038 = vpack.c.b16 %v1014, %v1013
    %v1039 = vpack.c.b16 %v1016, %v1015
    %v1040 = vpack.c.b16 %v1018, %v1017
    %v1041 = vpack.c.b16 %v1020, %v1019
    %v1042 = vpack.c.b16 %v1022, %v1021
    %v1043 = vpack.c.b16 %v1024, %v1023
    %v1044 = vpack.c.b16 %v1026, %v1025
    %v1045 = vpack.c.b16 %v1028, %v1027
    %v1046 = vpack.c.b16 %v1030, %v1029
    %1063 = vmatprep.subr.bf16.mxu0 0
    %1064 = vmatpush1.bf16.msra.mxu0 %v1031
    %1065 = vmatprep.subr.bf16.mxu0 0
    %1066 = vmatpush1.bf16.msra.mxu0 %v1032
    %1067 = vmatprep.subr.bf16.mxu0 0
    %1068 = vmatpush1.bf16.msra.mxu0 %v1033
    %1069 = vmatprep.subr.bf16.mxu0 0
    %1070 = vmatpush1.bf16.msra.mxu0 %v1034
    %1071 = vmatprep.subr.bf16.mxu0 0
    %1072 = vmatpush1.bf16.msra.mxu0 %v1035
    %1073 = vmatprep.subr.bf16.mxu0 0
    %1074 = vmatpush1.bf16.msra.mxu0 %v1036
    %1075 = vmatprep.subr.bf16.mxu0 0
    %1076 = vmatpush1.bf16.msra.mxu0 %v1037
    %1077 = vmatprep.subr.bf16.mxu0 0
    %1078 = vmatpush1.bf16.msra.mxu0 %v1038
    %1079 = vmatprep.subr.bf16.mxu0 0
    %1080 = vmatpush1.bf16.msra.mxu0 %v1039
    %1081 = vmatprep.subr.bf16.mxu0 0
    %1082 = vmatpush1.bf16.msra.mxu0 %v1040
    %1083 = vmatprep.subr.bf16.mxu0 0
    %1084 = vmatpush1.bf16.msra.mxu0 %v1041
    %1085 = vmatprep.subr.bf16.mxu0 0
    %1086 = vmatpush1.bf16.msra.mxu0 %v1042
    %1087 = vmatprep.subr.bf16.mxu0 0
    %1088 = vmatpush1.bf16.msra.mxu0 %v1043
    %1089 = vmatprep.subr.bf16.mxu0 0
    %1090 = vmatpush1.bf16.msra.mxu0 %v1044
    %1091 = vmatprep.subr.bf16.mxu0 0
    %1092 = vmatpush1.bf16.msra.mxu0 %v1045
    %1093 = vmatprep.subr.bf16.mxu0 0
    %1094 = vmatpush1.bf16.msra.mxu0 %v1046
    %1095 = vmatprep.mubr.bf16.mxu0 %v927
    %1096 = vmatmul.mubr.bf16.gmra.mrb[0].mxu0 %v926
    %v1097 = vpop.f32.mrb[0].mxu0
    %v1098 = vadd.f32 %v965, %v1097
    %v1099 = vpop.f32.mrb[0].mxu0
    %v1100 = vpop.f32.mrb[0].mxu0
    %v1101 = vadd.f32 %v965, %v1100
    %v1102 = vpop.f32.mrb[0].mxu0
    %1103 = vdwg.mxu0
    %v1104 = vmax.f32 %v1098, 0.0
    %v1105 = vmax.f32 %v1101, 0.0
    %v1106 = vpack.c.bf16 %v1105, %v1104
    %v1107 = vld [vmem:[#allocation22] sm:$0xf]
    %v1108 = vld [vmem:[#allocation22 + $0x4] sm:$0xf]
    %v1109 = vld [vmem:[#allocation22 + $0x8] sm:$0xf]
    %v1110 = vld [vmem:[#allocation22 + $0xc] sm:$0xf]
    %v1111 = vld [vmem:[#allocation22 + $0x10] sm:$0xf]
    %v1112 = vld [vmem:[#allocation22 + $0x14] sm:$0xf]
    %v1113 = vld [vmem:[#allocation22 + $0x18] sm:$0xf]
    %v1114 = vld [vmem:[#allocation22 + $0x1c] sm:$0xf]
    %v1115 = vld [vmem:[#allocation22 + $0x20] sm:$0xf]
    %v1116 = vld [vmem:[#allocation22 + $0x24] sm:$0xf]
    %v1117 = vld [vmem:[#allocation22 + $0x28] sm:$0xf]
    %v1118 = vld [vmem:[#allocation22 + $0x2c] sm:$0xf]
    %v1119 = vld [vmem:[#allocation22 + $0x30] sm:$0xf]
    %v1120 = vld [vmem:[#allocation22 + $0x34] sm:$0xf]
    %v1121 = vld [vmem:[#allocation22 + $0x38] sm:$0xf]
    %v1122 = vld [vmem:[#allocation22 + $0x3c] sm:$0xf]
    %v1123 = vld [vmem:[#allocation23] sm:$0x1]
    %v1125 = vlaneseq
    %v1126 = vshrl.u32 %v1125, 7
    %v1127 = vsub.s32 0, %v1126
    %v1128 = vrot.slane %v1123, %v1127
    %v1146 = vunpack.c.l.b16 %v1107
    %v1147 = vunpack.c.l.b16 %v1108
    %v1148 = vunpack.c.l.b16 %v1109
    %v1149 = vunpack.c.l.b16 %v1110
    %v1150 = vunpack.c.l.b16 %v1111
    %v1151 = vunpack.c.l.b16 %v1112
    %v1152 = vunpack.c.l.b16 %v1113
    %v1153 = vunpack.c.l.b16 %v1114
    %v1154 = vunpack.c.l.b16 %v1115
    %v1155 = vunpack.c.l.b16 %v1116
    %v1156 = vunpack.c.l.b16 %v1117
    %v1157 = vunpack.c.l.b16 %v1118
    %v1158 = vunpack.c.l.b16 %v1119
    %v1159 = vunpack.c.l.b16 %v1120
    %v1160 = vunpack.c.l.b16 %v1121
    %v1161 = vunpack.c.l.b16 %v1122
    %v1162 = vpack.c.b16 %v1147, %v1146
    %v1163 = vpack.c.b16 %v1149, %v1148
    %v1164 = vpack.c.b16 %v1151, %v1150
    %v1165 = vpack.c.b16 %v1153, %v1152
    %v1166 = vpack.c.b16 %v1155, %v1154
    %v1167 = vpack.c.b16 %v1157, %v1156
    %v1168 = vpack.c.b16 %v1159, %v1158
    %v1169 = vpack.c.b16 %v1161, %v1160
    %1178 = vmatprep.subr.bf16.mxu0 0
    %1179 = vmatpush1.bf16.msra.mxu0 %v1162
    %1180 = vmatprep.subr.bf16.mxu0 0
    %1181 = vmatpush1.bf16.msra.mxu0 %v1163
    %1182 = vmatprep.subr.bf16.mxu0 0
    %1183 = vmatpush1.bf16.msra.mxu0 %v1164
    %1184 = vmatprep.subr.bf16.mxu0 0
    %1185 = vmatpush1.bf16.msra.mxu0 %v1165
    %1186 = vmatprep.subr.bf16.mxu0 0
    %1187 = vmatpush1.bf16.msra.mxu0 %v1166
    %1188 = vmatprep.subr.bf16.mxu0 0
    %1189 = vmatpush1.bf16.msra.mxu0 %v1167
    %1190 = vmatprep.subr.bf16.mxu0 0
    %1191 = vmatpush1.bf16.msra.mxu0 %v1168
    %1192 = vmatprep.subr.bf16.mxu0 0
    %1193 = vmatpush1.bf16.msra.mxu0 %v1169
    %1194 = vmatprep.subr.bf16.mxu0 0
    %1195 = vmatpush1.bf16.msra.mxu0 0
    %1196 = vmatprep.subr.bf16.mxu0 0
    %1197 = vmatpush1.bf16.msra.mxu0 0
    %1198 = vmatprep.subr.bf16.mxu0 0
    %1199 = vmatpush1.bf16.msra.mxu0 0
    %1200 = vmatprep.subr.bf16.mxu0 0
    %1201 = vmatpush1.bf16.msra.mxu0 0
    %1202 = vmatprep.subr.bf16.mxu0 0
    %1203 = vmatpush1.bf16.msra.mxu0 0
    %1204 = vmatprep.subr.bf16.mxu0 0
    %1205 = vmatpush1.bf16.msra.mxu0 0
    %1206 = vmatprep.subr.bf16.mxu0 0
    %1207 = vmatpush1.bf16.msra.mxu0 0
    %1208 = vmatprep.subr.bf16.mxu0 0
    %1209 = vmatpush1.bf16.msra.mxu0 0
    %1210 = vmatprep.mubr.bf16.mxu0 0
    %1211 = vmatmul.mubr.bf16.gmra.mrb[0].mxu0 %v1106
    %v1212 = vpop.f32.mrb[0].mxu0
    %v1213 = vadd.f32 %v1128, %v1212
    %v1214 = vpop.f32.mrb[0].mxu0
    %v1215 = vpop.f32.mrb[0].mxu0
    %v1216 = vadd.f32 %v1128, %v1215
    %v1217 = vpop.f32.mrb[0].mxu0
    %1218 = vdwg.mxu0
    %v1219 = vmax.f32 %v1213, 0.0
    %v1220 = vmax.f32 %v1216, 0.0
    %v1221 = vpack.c.bf16 %v1220, %v1219
    %v1222 = vld [vmem:[#allocation25] sm:$0xf]
    %v1223 = vld [vmem:[#allocation25 + $0x4] sm:$0xf]
    %v1224 = vld [vmem:[#allocation25 + $0x8] sm:$0xf]
    %v1225 = vld [vmem:[#allocation25 + $0xc] sm:$0xf]
    %v1226 = vld [vmem:[#allocation25 + $0x10] sm:$0xf]
    %v1227 = vld [vmem:[#allocation25 + $0x14] sm:$0xf]
    %v1228 = vld [vmem:[#allocation25 + $0x18] sm:$0xf]
    %v1229 = vld [vmem:[#allocation25 + $0x1c] sm:$0xf]
    %v1230 = vld [vmem:[#allocation25 + $0x20] sm:$0xf]
    %v1231 = vld [vmem:[#allocation25 + $0x24] sm:$0xf]
    %v1232 = vld [vmem:[#allocation25 + $0x28] sm:$0xf]
    %v1233 = vld [vmem:[#allocation25 + $0x2c] sm:$0xf]
    %v1234 = vld [vmem:[#allocation25 + $0x30] sm:$0xf]
    %v1235 = vld [vmem:[#allocation25 + $0x34] sm:$0xf]
    %v1236 = vld [vmem:[#allocation25 + $0x38] sm:$0xf]
    %v1237 = vld [vmem:[#allocation25 + $0x3c] sm:$0xf]
    %v1238 = vld [vmem:[#allocation26] sm:$0x1]
    %v1240 = vlaneseq
    %v1241 = vshrl.u32 %v1240, 7
    %v1242 = vsub.s32 0, %v1241
    %v1243 = vrot.slane %v1238, %v1242
    %v1261 = vunpack.c.l.b16 %v1222
    %v1262 = vunpack.c.l.b16 %v1223
    %v1263 = vunpack.c.l.b16 %v1224
    %v1264 = vunpack.c.l.b16 %v1225
    %v1265 = vunpack.c.l.b16 %v1226
    %v1266 = vunpack.c.l.b16 %v1227
    %v1267 = vunpack.c.l.b16 %v1228
    %v1268 = vunpack.c.l.b16 %v1229
    %v1269 = vunpack.c.l.b16 %v1230
    %v1270 = vunpack.c.l.b16 %v1231
    %v1271 = vunpack.c.l.b16 %v1232
    %v1272 = vunpack.c.l.b16 %v1233
    %v1273 = vunpack.c.l.b16 %v1234
    %v1274 = vunpack.c.l.b16 %v1235
    %v1275 = vunpack.c.l.b16 %v1236
    %v1276 = vunpack.c.l.b16 %v1237
    %v1277 = vpack.c.b16 %v1262, %v1261
    %v1278 = vpack.c.b16 %v1264, %v1263
    %v1279 = vpack.c.b16 %v1266, %v1265
    %v1280 = vpack.c.b16 %v1268, %v1267
    %v1281 = vpack.c.b16 %v1270, %v1269
    %v1282 = vpack.c.b16 %v1272, %v1271
    %v1283 = vpack.c.b16 %v1274, %v1273
    %v1284 = vpack.c.b16 %v1276, %v1275
    %1293 = vmatprep.subr.bf16.mxu0 0
    %1294 = vmatpush1.bf16.msra.mxu0 %v1277
    %1295 = vmatprep.subr.bf16.mxu0 0
    %1296 = vmatpush1.bf16.msra.mxu0 %v1278
    %1297 = vmatprep.subr.bf16.mxu0 0
    %1298 = vmatpush1.bf16.msra.mxu0 %v1279
    %1299 = vmatprep.subr.bf16.mxu0 0
    %1300 = vmatpush1.bf16.msra.mxu0 %v1280
    %1301 = vmatprep.subr.bf16.mxu0 0
    %1302 = vmatpush1.bf16.msra.mxu0 %v1281
    %1303 = vmatprep.subr.bf16.mxu0 0
    %1304 = vmatpush1.bf16.msra.mxu0 %v1282
    %1305 = vmatprep.subr.bf16.mxu0 0
    %1306 = vmatpush1.bf16.msra.mxu0 %v1283
    %1307 = vmatprep.subr.bf16.mxu0 0
    %1308 = vmatpush1.bf16.msra.mxu0 %v1284
    %1309 = vmatprep.subr.bf16.mxu0 0
    %1310 = vmatpush1.bf16.msra.mxu0 0
    %1311 = vmatprep.subr.bf16.mxu0 0
    %1312 = vmatpush1.bf16.msra.mxu0 0
    %1313 = vmatprep.subr.bf16.mxu0 0
    %1314 = vmatpush1.bf16.msra.mxu0 0
    %1315 = vmatprep.subr.bf16.mxu0 0
    %1316 = vmatpush1.bf16.msra.mxu0 0
    %1317 = vmatprep.subr.bf16.mxu0 0
    %1318 = vmatpush1.bf16.msra.mxu0 0
    %1319 = vmatprep.subr.bf16.mxu0 0
    %1320 = vmatpush1.bf16.msra.mxu0 0
    %1321 = vmatprep.subr.bf16.mxu0 0
    %1322 = vmatpush1.bf16.msra.mxu0 0
    %1323 = vmatprep.subr.bf16.mxu0 0
    %1324 = vmatpush1.bf16.msra.mxu0 0
    %1325 = vmatprep.mubr.bf16.mxu0 0
    %1326 = vmatmul.mubr.bf16.gmra.mrb[0].mxu0 %v1221
    %v1327 = vpop.f32.mrb[0].mxu0
    %v1328 = vadd.f32 %v1243, %v1327
    %v1329 = vpop.f32.mrb[0].mxu0
    %v1330 = vpop.f32.mrb[0].mxu0
    %v1331 = vadd.f32 %v1243, %v1330
    %v1332 = vpop.f32.mrb[0].mxu0
    %1333 = vdwg.mxu0
    %1334 = vst [vmem:[#allocation28] sm:$0xff] %v1328
    %1335 = vst [vmem:[#allocation28 + $0x8] sm:$0xff] %v1331
    // Predicated region
    $region130: #{tpu_custom_call.1} parent=1 // pred_check
      _
    $region131: #{tpu_custom_call.1} parent=1 // pred_check_branch
      %1337 = sbr.rel (0) target = $region133
    $region132: #{tpu_custom_call.1} parent=1 // pred_region
      %s1339 = ssub.s32 256, 256
      %1340 = vsyncadd [#allocation4], %s1339
      %s1341 = sshll.u32 [#allocation28], 4
      %s1342 = int_to_ptr.vmem [resolvable:$true] %s1341
      %1347 = dma.vmem_to_hbm [thread:$0]  %s1342, 256, %s16, [#allocation4], 128, 128, 8
    $region133: #{tpu_custom_call.1} parent=1 // pred_fallthru
      _
    // Predicated region
    $region134: #{tpu_custom_call.1} parent=1 // pred_check
      _
    $region135: #{tpu_custom_call.1} parent=1 // pred_check_branch
      %1349 = sbr.rel (0) target = $region137
    $region136: #{tpu_custom_call.1} parent=1 // pred_region
      %1350 = dma.done [#allocation4], 256
    $region137: #{tpu_custom_call.1} parent=1 // pred_fallthru
      _
    %1351 = vsyncpa [#allocation3], 1
    %1352 = vsyncpa [#allocation6], 1
    %1353 = vsyncpa [#allocation9], 1
    %1354 = vsyncpa [#allocation12], 1
    %1355 = vsyncpa [#allocation15], 1
    %1356 = vsyncpa [#allocation18], 1
    %1357 = vsyncpa [#allocation21], 1
    %1358 = vsyncpa [#allocation24], 1
    %1359 = vsyncpa [#allocation27], 1
    %1360 = vsyncpa [#allocation4], 1

</llo_original>
